<compile_context>
chip_gen: v7x
topology: tpu7x:2x2x1
jax: 0.10.0
libtpu: 0.0.40
codegen_flags: <defaults>
</compile_context>

<pallas_src>
import functools

import jax
import jax.numpy as jnp
from jax.experimental import pallas as pl
from jax.experimental.pallas import tpu as pltpu


# ----------------------------- helpers (in-kernel) ---------------------------


def _layernorm(x, g, b, eps):
    mean = jnp.mean(x, axis=-1, keepdims=True)
    var = jnp.mean((x - mean) ** 2, axis=-1, keepdims=True)
    return (x - mean) * jax.lax.rsqrt(var + eps) * g + b


# ----------------------------- Pallas kernels --------------------------------


def _emb_ln_kernel(x_ref, g_ref, b_ref, o_ref, *, eps):
    o_ref[...] = _layernorm(x_ref[...], g_ref[...], b_ref[...], eps)


def embedding_layernorm(x, gamma, beta, eps=1e-12):
    """LayerNorm over the last axis (no residual input)."""
    M, D = x.shape
    return pl.pallas_call(
        functools.partial(_emb_ln_kernel, eps=eps),
        out_shape=jax.ShapeDtypeStruct((M, D), jnp.float32),
        grid=(1,),
        in_specs=[
            pl.BlockSpec((M, D), lambda i: (0, 0)),
            pl.BlockSpec((1, D), lambda i: (0, 0)),
            pl.BlockSpec((1, D), lambda i: (0, 0)),
        ],
        out_specs=pl.BlockSpec((M, D), lambda i: (0, 0)),
    )(x, gamma.reshape(1, D), beta.reshape(1, D))


def _encoder_kernel(x_in_ref, bias_ref,
                    wqkv_ref, bqkv_ref, wo_ref, bo_ref,
                    ln1_g_ref, ln1_b_ref,
                    wi_ref, bi_ref, wf_ref, bf_ref,
                    ln2_g_ref, ln2_b_ref,
                    hs_ref, x_scr,
                    *, num_heads, head_dim, eps):
    """One fused BERT encoder layer. grid axis 0 = layer index (sequential)."""
    layer = pl.program_id(0)

    @pl.when(layer == 0)
    def _():
        x_scr[...] = x_in_ref[...]

    x = x_scr[...]                                   # [BS, D] f32, resident in VMEM
    D = num_heads * head_dim
    scale = 1.0 / (head_dim ** 0.5)

    # --- fused QKV projection: [BS, 3D] ---
    qkv = jnp.dot(x, wqkv_ref[0], preferred_element_type=jnp.float32) + bqkv_ref[0]

    # --- multi-head self-attention over a block-diagonal [BS, BS] score matrix ---
    # head h occupies columns [h*Dh, (h+1)*Dh) of each Q/K/V section, so
    # ctx @ Wo == sum_h ctx_h @ Wo[h*Dh:(h+1)*Dh, :]  (no concat / transpose needed).
    wo = wo_ref[0]
    attn_out = None
    for h in range(num_heads):
        lo = h * head_dim
        q = qkv[:, lo:lo + head_dim]
        k = qkv[:, D + lo:D + lo + head_dim]
        v = qkv[:, 2 * D + lo:2 * D + lo + head_dim]
        s = jnp.dot(q, k.T, preferred_element_type=jnp.float32) * scale + bias_ref[...]
        s = s - jnp.max(s, axis=-1, keepdims=True)
        p = jnp.exp(s)
        p = p * pl.reciprocal(jnp.sum(p, axis=-1, keepdims=True), approx=True)
        ctx_h = jnp.dot(p, v, preferred_element_type=jnp.float32)
        part = jnp.dot(ctx_h, wo[lo:lo + head_dim, :],
                       preferred_element_type=jnp.float32)
        attn_out = part if attn_out is None else attn_out + part
    attn_out = attn_out + bo_ref[0]

    # --- add & LayerNorm 1 (fused epilogue) ---
    x = _layernorm(attn_out + x, ln1_g_ref[0], ln1_b_ref[0], eps)

    # --- feed-forward (fused up-proj + gelu + down-proj) ---
    ff = jnp.dot(x, wi_ref[0], preferred_element_type=jnp.float32) + bi_ref[0]
    # TODO(synk): HF BERT default act is erf-gelu; tanh-approx gelu used here (EUP friendly).
    ff = jax.nn.gelu(ff, approximate=True)
    ff = jnp.dot(ff, wf_ref[0], preferred_element_type=jnp.float32) + bf_ref[0]

    # --- add & LayerNorm 2 ---
    x = _layernorm(ff + x, ln2_g_ref[0], ln2_b_ref[0], eps)

    x_scr[...] = x          # keep activation resident for the next layer
    hs_ref[0] = x           # per-layer hidden state output


def bert_encoder(x2d, bias, lw, num_heads, head_dim, eps=1e-12):
    """Runs all encoder layers in one pallas_call. Returns [L, BS, D] hidden states."""
    BS, D = x2d.shape
    L = lw["wqkv"].shape[0]
    I = lw["wi"].shape[2]

    def per_layer(shape):
        # per-layer weight block: leading dim 1 indexed by the layer grid axis
        return pl.BlockSpec((1,) + shape, lambda l, _s=shape: (l,) + (0,) * len(_s))

    return pl.pallas_call(
        functools.partial(_encoder_kernel, num_heads=num_heads,
                          head_dim=head_dim, eps=eps),
        out_shape=jax.ShapeDtypeStruct((L, BS, D), jnp.float32),
        grid=(L,),
        in_specs=[
            pl.BlockSpec((BS, D), lambda l: (0, 0)),     # x (consumed at layer 0)
            pl.BlockSpec((BS, BS), lambda l: (0, 0)),    # block-diagonal attention bias
            per_layer((D, 3 * D)), per_layer((1, 3 * D)),   # wqkv, bqkv
            per_layer((D, D)), per_layer((1, D)),           # wo, bo
            per_layer((1, D)), per_layer((1, D)),           # ln1 gamma/beta
            per_layer((D, I)), per_layer((1, I)),           # wi, bi
            per_layer((I, D)), per_layer((1, D)),           # wf, bf
            per_layer((1, D)), per_layer((1, D)),           # ln2 gamma/beta
        ],
        out_specs=pl.BlockSpec((1, BS, D), lambda l: (l, 0, 0)),
        scratch_shapes=[pltpu.VMEM((BS, D), jnp.float32)],
        compiler_params=pltpu.CompilerParams(dimension_semantics=("arbitrary",)),
    )(x2d, bias,
      lw["wqkv"], lw["bqkv"], lw["wo"], lw["bo"],
      lw["ln1_g"], lw["ln1_b"],
      lw["wi"], lw["bi"], lw["wf"], lw["bf"],
      lw["ln2_g"], lw["ln2_b"])


def _head_kernel(cls_ref, ex_ref, pw_ref, pb_ref,
                 w1p_ref, w1e_ref, b1_ref, w2_ref, b2_ref, o_ref):
    # pooler: tanh(W_p @ hidden[:, 0] + b_p)
    pooled = jnp.tanh(
        jnp.dot(cls_ref[...], pw_ref[...], preferred_element_type=jnp.float32)
        + pb_ref[...])
    # torch.cat((pooled, features, keyword), 1) @ W1  ==  pooled @ W1[:D] + extras @ W1[D:]
    h = (jnp.dot(pooled, w1p_ref[...], preferred_element_type=jnp.float32)
         + jnp.dot(ex_ref[...], w1e_ref[...], preferred_element_type=jnp.float32)
         + b1_ref[...])
    h = jnp.tanh(h)
    # TODO(synk): nn.Dropout(dropout_rate) is identity in eval mode; train-mode dropout omitted.
    o_ref[...] = (jnp.dot(h, w2_ref[...], preferred_element_type=jnp.float32)
                  + b2_ref[...])


def pooler_classifier(cls_tok, extras, pooler_w, pooler_b, w1, b1, w2, b2):
    """Fused pooler + concat-features classifier MLP."""
    B, D = cls_tok.shape
    E = extras.shape[1]
    H = w1.shape[1]
    L = w2.shape[1]
    w1_p = w1[:D]      # rows multiplying pooled_output
    w1_e = w1[D:]      # rows multiplying [features, keyword_tokens]
    return pl.pallas_call(
        _head_kernel,
        out_shape=jax.ShapeDtypeStruct((B, L), jnp.float32),
        grid=(1,),
        in_specs=[
            pl.BlockSpec((B, D), lambda i: (0, 0)),
            pl.BlockSpec((B, E), lambda i: (0, 0)),
            pl.BlockSpec((D, D), lambda i: (0, 0)),
            pl.BlockSpec((1, D), lambda i: (0, 0)),
            pl.BlockSpec((D, H), lambda i: (0, 0)),
            pl.BlockSpec((E, H), lambda i: (0, 0)),
            pl.BlockSpec((1, H), lambda i: (0, 0)),
            pl.BlockSpec((H, L), lambda i: (0, 0)),
            pl.BlockSpec((1, L), lambda i: (0, 0)),
        ],
        out_specs=pl.BlockSpec((B, L), lambda i: (0, 0)),
    )(cls_tok, extras, pooler_w, pooler_b.reshape(1, D),
      w1_p, w1_e, b1.reshape(1, H), w2, b2.reshape(1, L))


# ------------------------------ model config ---------------------------------

CFG = dict(
    vocab_size=64,
    max_position=16,
    type_vocab=2,
    hidden=32,
    num_heads=2,
    head_dim=16,
    intermediate=64,
    num_layers=2,
    num_extra_features=3,   # `features` width
    keyword_width=1,        # the "+ 1" in the classifier input dim
    classifier_hidden=16,   # hidden_dim
    num_labels=4,
)


def init_params(key, cfg):
    D = cfg["hidden"]
    I = cfg["intermediate"]
    L = cfg["num_layers"]
    F = D + cfg["num_extra_features"] + cfg["keyword_width"]
    ks = iter(jax.random.split(key, 128))

    def w(shape, scale=0.02):
        return (scale * jax.random.normal(next(ks), shape)).astype(jnp.float32)

    # per-layer weights stacked along a leading layer axis (consumed by the fused encoder)
    layers = dict(
        wqkv=jnp.stack([jnp.concatenate([w((D, D)), w((D, D)), w((D, D))], axis=1)
                        for _ in range(L)]),
        bqkv=jnp.zeros((L, 1, 3 * D), jnp.float32),
        wo=jnp.stack([w((D, D)) for _ in range(L)]),
        bo=jnp.zeros((L, 1, D), jnp.float32),
        ln1_g=jnp.ones((L, 1, D), jnp.float32),
        ln1_b=jnp.zeros((L, 1, D), jnp.float32),
        wi=jnp.stack([w((D, I)) for _ in range(L)]),
        bi=jnp.zeros((L, 1, I), jnp.float32),
        wf=jnp.stack([w((I, D)) for _ in range(L)]),
        bf=jnp.zeros((L, 1, D), jnp.float32),
        ln2_g=jnp.ones((L, 1, D), jnp.float32),
        ln2_b=jnp.zeros((L, 1, D), jnp.float32),
    )

    return dict(
        word_emb=w((cfg["vocab_size"], D)),
        pos_emb=w((cfg["max_position"], D)),
        type_emb=w((cfg["type_vocab"], D)),
        emb_ln_g=jnp.ones((D,), jnp.float32),
        emb_ln_b=jnp.zeros((D,), jnp.float32),
        pooler_w=w((D, D)),
        pooler_b=jnp.zeros((D,), jnp.float32),
        cls_w1=w((F, cfg["classifier_hidden"])),
        cls_b1=jnp.zeros((cfg["classifier_hidden"],), jnp.float32),
        cls_w2=w((cfg["classifier_hidden"], cfg["num_labels"])),
        cls_b2=jnp.zeros((cfg["num_labels"],), jnp.float32),
        layers=layers,
    )


# ------------------------------ forward pass ---------------------------------


def custom_bert_forward(params, input_ids, attention_mask, features, keyword_tokens, cfg):
    B, S = input_ids.shape
    D, H, Dh, L = cfg["hidden"], cfg["num_heads"], cfg["head_dim"], cfg["num_layers"]
    BS = B * S

    # embeddings (gather is glue; normalization done in Pallas)
    emb = (params["word_emb"][input_ids]
           + params["pos_emb"][jnp.arange(S)][None, :, :]
           + params["type_emb"][0][None, None, :])   # token_type_ids == 0
    x2d = embedding_layernorm(emb.reshape(BS, D).astype(jnp.float32),
                              params["emb_ln_g"], params["emb_ln_b"])

    # block-diagonal additive attention bias over flattened [BS, BS] scores:
    # -1e9 across batches (exp underflows to 0), -10000 * (1 - mask) for masked keys.
    batch_ids = jnp.repeat(jnp.arange(B), S)
    same_batch = batch_ids[:, None] == batch_ids[None, :]
    key_bias = (1.0 - attention_mask.reshape(BS).astype(jnp.float32)) * -10000.0
    bias = jnp.where(same_batch, key_bias[None, :], -1e9).astype(jnp.float32)

    hs = bert_encoder(x2d, bias, params["layers"], H, Dh)       # [L, BS, D]
    hs4 = hs.reshape(L, B, S, D)

    # pooler + torch.cat((pooled, features, keyword), 1) + classifier MLP (one kernel)
    cls_tok = hs4[L - 1][:, 0, :]
    extras = jnp.concatenate([features.astype(jnp.float32),
                              keyword_tokens.astype(jnp.float32)], axis=1)
    logits = pooler_classifier(cls_tok, extras,
                               params["pooler_w"], params["pooler_b"],
                               params["cls_w1"], params["cls_b1"],
                               params["cls_w2"], params["cls_b2"])

    hidden_states = (x2d.reshape(B, S, D),) + tuple(hs4[l] for l in range(L))
    return logits, hidden_states


# ---------------------------------- main --------------------------------------

if __name__ == "__main__":
    cfg = CFG
    key = jax.random.PRNGKey(0)
    kp, ki, km, kf, kk = jax.random.split(key, 5)

    B, S = 2, 8
    params = init_params(kp, cfg)

    input_ids = jax.random.randint(ki, (B, S), 0, cfg["vocab_size"], dtype=jnp.int32)
    attention_mask = jnp.ones((B, S), dtype=jnp.int32).at[1, 6:].set(0)
    features = jax.random.normal(kf, (B, cfg["num_extra_features"]), dtype=jnp.float32)
    keyword_tokens = jax.random.normal(kk, (B, cfg["keyword_width"]), dtype=jnp.float32)

    fwd = jax.jit(functools.partial(custom_bert_forward, cfg=cfg))
    logits, hidden_states = fwd(params, input_ids, attention_mask,
                                features, keyword_tokens)

    jax.block_until_ready(logits)
    jax.block_until_ready(hidden_states)

    assert logits.shape == (B, cfg["num_labels"])
    assert len(hidden_states) == cfg["num_layers"] + 1
    assert hidden_states[0].shape == (B, S, cfg["hidden"])
    print("KERNEL_OK")
</pallas_src>

<mosaic_0001>
module attributes {stable_mosaic.version = 11 : i64} {
  func.func @_emb_ln_kernel(%arg0: i32, %arg1: memref<16x32xf32, #tpu.memory_space<vmem>>, %arg2: memref<1x32xf32, #tpu.memory_space<vmem>>, %arg3: memref<1x32xf32, #tpu.memory_space<vmem>>, %arg4: memref<16x32xf32, #tpu.memory_space<vmem>>) attributes {dimension_semantics = [#tpu.dimension_semantics<arbitrary>], iteration_bounds = array<i64: 1>, scalar_prefetch = 0 : i64, scratch_operands = 0 : i64, tpu.core_type = #tpu.core_type<tc>, window_params = [{pipeline_mode = #tpu.pipeline_mode<synchronous>, transform_indices = @transform_0, window_bounds = array<i64: 16, 32>}, {pipeline_mode = #tpu.pipeline_mode<synchronous>, transform_indices = @transform_1, window_bounds = array<i64: 1, 32>}, {pipeline_mode = #tpu.pipeline_mode<synchronous>, transform_indices = @transform_2, window_bounds = array<i64: 1, 32>}, {pipeline_mode = #tpu.pipeline_mode<synchronous>, transform_indices = @transform_3, window_bounds = array<i64: 16, 32>}]} {
    %c0 = arith.constant 0 : index
    %c0_0 = arith.constant 0 : index
    %0 = vector.load %arg1[%c0, %c0_0] : memref<16x32xf32, #tpu.memory_space<vmem>>, vector<16x32xf32>
    %c0_1 = arith.constant 0 : index
    %c0_2 = arith.constant 0 : index
    %1 = vector.load %arg2[%c0_1, %c0_2] : memref<1x32xf32, #tpu.memory_space<vmem>>, vector<1x32xf32>
    %c0_3 = arith.constant 0 : index
    %c0_4 = arith.constant 0 : index
    %2 = vector.load %arg3[%c0_3, %c0_4] : memref<1x32xf32, #tpu.memory_space<vmem>>, vector<1x32xf32>
    %cst = arith.constant dense<0.000000e+00> : vector<16xf32>
    %3 = vector.multi_reduction <add>, %0, %cst [1] : vector<16x32xf32> to vector<16xf32>
    %4 = vector.shape_cast %3 : vector<16xf32> to vector<16x1xf32>
    %cst_5 = arith.constant 3.200000e+01 : f32
    %5 = vector.broadcast %cst_5 : f32 to vector<16x1xf32>
    %6 = arith.divf %4, %5 : vector<16x1xf32>
    %7 = vector.broadcast %6 : vector<16x1xf32> to vector<16x32xf32>
    %8 = arith.subf %0, %7 : vector<16x32xf32>
    %9 = arith.mulf %8, %8 : vector<16x32xf32>
    %cst_6 = arith.constant dense<0.000000e+00> : vector<16xf32>
    %10 = vector.multi_reduction <add>, %9, %cst_6 [1] : vector<16x32xf32> to vector<16xf32>
    %11 = vector.shape_cast %10 : vector<16xf32> to vector<16x1xf32>
    %cst_7 = arith.constant 3.200000e+01 : f32
    %12 = vector.broadcast %cst_7 : f32 to vector<16x1xf32>
    %13 = arith.divf %11, %12 : vector<16x1xf32>
    %14 = vector.broadcast %6 : vector<16x1xf32> to vector<16x32xf32>
    %15 = arith.subf %0, %14 : vector<16x32xf32>
    %cst_8 = arith.constant 9.99999996E-13 : f32
    %16 = vector.broadcast %cst_8 : f32 to vector<16x1xf32>
    %17 = arith.addf %13, %16 : vector<16x1xf32>
    %18 = math.rsqrt %17 : vector<16x1xf32>
    %19 = vector.broadcast %18 : vector<16x1xf32> to vector<16x32xf32>
    %20 = arith.mulf %15, %19 : vector<16x32xf32>
    %21 = vector.broadcast %1 : vector<1x32xf32> to vector<16x32xf32>
    %22 = arith.mulf %20, %21 : vector<16x32xf32>
    %23 = vector.broadcast %2 : vector<1x32xf32> to vector<16x32xf32>
    %24 = arith.addf %22, %23 : vector<16x32xf32>
    %c0_9 = arith.constant 0 : index
    %c0_10 = arith.constant 0 : index
    %25 = vector.load %arg4[%c0_9, %c0_10] : memref<16x32xf32, #tpu.memory_space<vmem>>, vector<16x32xf32>
    tpu.vector_store %arg4[%c0_9, %c0_10], %24 {strides = array<i32>} : memref<16x32xf32, #tpu.memory_space<vmem>>, vector<16x32xf32>,
    return
  }
  func.func @transform_0(%arg0: i32) -> (i32, i32) {
    %c0_i32 = arith.constant 0 : i32
    %c0_i32_0 = arith.constant 0 : i32
    %c0_i32_1 = arith.constant 0 : i32
    return %c0_i32, %c0_i32_0 : i32, i32
  }
  func.func @transform_1(%arg0: i32) -> (i32, i32) {
    %c0_i32 = arith.constant 0 : i32
    %c0_i32_0 = arith.constant 0 : i32
    %c0_i32_1 = arith.constant 0 : i32
    return %c0_i32, %c0_i32_0 : i32, i32
  }
  func.func @transform_2(%arg0: i32) -> (i32, i32) {
    %c0_i32 = arith.constant 0 : i32
    %c0_i32_0 = arith.constant 0 : i32
    %c0_i32_1 = arith.constant 0 : i32
    return %c0_i32, %c0_i32_0 : i32, i32
  }
  func.func @transform_3(%arg0: i32) -> (i32, i32) {
    %c0_i32 = arith.constant 0 : i32
    %c0_i32_0 = arith.constant 0 : i32
    %c0_i32_1 = arith.constant 0 : i32
    return %c0_i32, %c0_i32_0 : i32, i32
  }
}

module attributes {stable_mosaic.version = 11 : i64} {
  func.func @_encoder_kernel(%arg0: i32, %arg1: memref<16x32xf32, #tpu.memory_space<vmem>>, %arg2: memref<16x16xf32, #tpu.memory_space<vmem>>, %arg3: memref<1x32x96xf32, #tpu.memory_space<vmem>>, %arg4: memref<1x1x96xf32, #tpu.memory_space<vmem>>, %arg5: memref<1x32x32xf32, #tpu.memory_space<vmem>>, %arg6: memref<1x1x32xf32, #tpu.memory_space<vmem>>, %arg7: memref<1x1x32xf32, #tpu.memory_space<vmem>>, %arg8: memref<1x1x32xf32, #tpu.memory_space<vmem>>, %arg9: memref<1x32x64xf32, #tpu.memory_space<vmem>>, %arg10: memref<1x1x64xf32, #tpu.memory_space<vmem>>, %arg11: memref<1x64x32xf32, #tpu.memory_space<vmem>>, %arg12: memref<1x1x32xf32, #tpu.memory_space<vmem>>, %arg13: memref<1x1x32xf32, #tpu.memory_space<vmem>>, %arg14: memref<1x1x32xf32, #tpu.memory_space<vmem>>, %arg15: memref<1x16x32xf32, #tpu.memory_space<vmem>>, %arg16: memref<16x32xf32, #tpu.memory_space<vmem>>) attributes {dimension_semantics = [#tpu.dimension_semantics<arbitrary>], iteration_bounds = array<i64: 2>, scalar_prefetch = 0 : i64, scratch_operands = 1 : i64, tpu.core_type = #tpu.core_type<tc>, window_params = [{pipeline_mode = #tpu.pipeline_mode<synchronous>, transform_indices = @transform_0, window_bounds = array<i64: 16, 32>}, {pipeline_mode = #tpu.pipeline_mode<synchronous>, transform_indices = @transform_1, window_bounds = array<i64: 16, 16>}, {transform_indices = @transform_2, window_bounds = array<i64: 1, 32, 96>}, {transform_indices = @transform_3, window_bounds = array<i64: 1, 1, 96>}, {transform_indices = @transform_4, window_bounds = array<i64: 1, 32, 32>}, {transform_indices = @transform_5, window_bounds = array<i64: 1, 1, 32>}, {transform_indices = @transform_6, window_bounds = array<i64: 1, 1, 32>}, {transform_indices = @transform_7, window_bounds = array<i64: 1, 1, 32>}, {transform_indices = @transform_8, window_bounds = array<i64: 1, 32, 64>}, {transform_indices = @transform_9, window_bounds = array<i64: 1, 1, 64>}, {transform_indices = @transform_10, window_bounds = array<i64: 1, 64, 32>}, {transform_indices = @transform_11, window_bounds = array<i64: 1, 1, 32>}, {transform_indices = @transform_12, window_bounds = array<i64: 1, 1, 32>}, {transform_indices = @transform_13, window_bounds = array<i64: 1, 1, 32>}, {transform_indices = @transform_14, window_bounds = array<i64: 1, 16, 32>}]} {
    %c0_i32 = arith.constant 0 : i32
    %0 = arith.cmpi eq, %arg0, %c0_i32 : i32
    %1 = arith.extui %0 : i1 to i32
    %c0_i32_0 = arith.constant 0 : i32
    %2 = arith.cmpi ne, %1, %c0_i32_0 : i32
    scf.if %2 {
      %c0_75 = arith.constant 0 : index
      %c0_76 = arith.constant 0 : index
      %147 = vector.load %arg1[%c0_75, %c0_76] : memref<16x32xf32, #tpu.memory_space<vmem>>, vector<16x32xf32>
      %c0_77 = arith.constant 0 : index
      %c0_78 = arith.constant 0 : index
      %148 = vector.load %arg16[%c0_77, %c0_78] : memref<16x32xf32, #tpu.memory_space<vmem>>, vector<16x32xf32>
      tpu.vector_store %arg16[%c0_77, %c0_78], %147 {strides = array<i32>} : memref<16x32xf32, #tpu.memory_space<vmem>>, vector<16x32xf32>,
    } else {
    }
    %c0 = arith.constant 0 : index
    %c0_1 = arith.constant 0 : index
    %3 = vector.load %arg16[%c0, %c0_1] : memref<16x32xf32, #tpu.memory_space<vmem>>, vector<16x32xf32>
    %c0_2 = arith.constant 0 : index
    %c0_3 = arith.constant 0 : index
    %c0_4 = arith.constant 0 : index
    %4 = vector.load %arg3[%c0_2, %c0_3, %c0_4] : memref<1x32x96xf32, #tpu.memory_space<vmem>>, vector<1x32x96xf32>
    %5 = vector.shape_cast %4 : vector<1x32x96xf32> to vector<32x96xf32>
    %cst = arith.constant dense<0.000000e+00> : vector<16x96xf32>
    %6 = tpu.matmul %3, %5, %cst {dimension_numbers = #tpu.dot_dimension_numbers<[1], [0], [0], [1], [0, 0, 1, 1], [], []>} : vector<16x32xf32>, vector<32x96xf32>, vector<16x96xf32> -> vector<16x96xf32>
    %c0_5 = arith.constant 0 : index
    %c0_6 = arith.constant 0 : index
    %c0_7 = arith.constant 0 : index
    %7 = vector.load %arg4[%c0_5, %c0_6, %c0_7] : memref<1x1x96xf32, #tpu.memory_space<vmem>>, vector<1x1x96xf32>
    %8 = vector.shape_cast %7 : vector<1x1x96xf32> to vector<1x96xf32>
    %9 = vector.broadcast %8 : vector<1x96xf32> to vector<16x96xf32>
    %10 = arith.addf %6, %9 : vector<16x96xf32>
    %c0_8 = arith.constant 0 : index
    %c0_9 = arith.constant 0 : index
    %c0_10 = arith.constant 0 : index
    %11 = vector.load %arg5[%c0_8, %c0_9, %c0_10] : memref<1x32x32xf32, #tpu.memory_space<vmem>>, vector<1x32x32xf32>
    %12 = vector.shape_cast %11 : vector<1x32x32xf32> to vector<32x32xf32>
    %13 = vector.extract_strided_slice %10 {offsets = [0, 0], sizes = [16, 16], strides = [1, 1]} : vector<16x96xf32> to vector<16x16xf32>
    %14 = vector.extract_strided_slice %10 {offsets = [0, 32], sizes = [16, 16], strides = [1, 1]} : vector<16x96xf32> to vector<16x16xf32>
    %15 = vector.extract_strided_slice %10 {offsets = [0, 64], sizes = [16, 16], strides = [1, 1]} : vector<16x96xf32> to vector<16x16xf32>
    %16 = tpu.transpose %14, [1, 0] : vector<16x16xf32> -> vector<16x16xf32>
    %cst_11 = arith.constant dense<0.000000e+00> : vector<16x16xf32>
    %17 = tpu.matmul %13, %16, %cst_11 {dimension_numbers = #tpu.dot_dimension_numbers<[1], [0], [0], [1], [0, 0, 1, 1], [], []>} : vector<16x16xf32>, vector<16x16xf32>, vector<16x16xf32> -> vector<16x16xf32>
    %cst_12 = arith.constant 2.500000e-01 : f32
    %18 = vector.broadcast %cst_12 : f32 to vector<16x16xf32>
    %19 = arith.mulf %17, %18 : vector<16x16xf32>
    %c0_13 = arith.constant 0 : index
    %c0_14 = arith.constant 0 : index
    %20 = vector.load %arg2[%c0_13, %c0_14] : memref<16x16xf32, #tpu.memory_space<vmem>>, vector<16x16xf32>
    %21 = arith.addf %19, %20 : vector<16x16xf32>
    %cst_15 = arith.constant dense<0xFF800000> : vector<16xf32>
    %22 = vector.multi_reduction <maximumf>, %21, %cst_15 [1] : vector<16x16xf32> to vector<16xf32>
    %23 = vector.shape_cast %22 : vector<16xf32> to vector<16x1xf32>
    %24 = vector.broadcast %23 : vector<16x1xf32> to vector<16x16xf32>
    %25 = arith.subf %21, %24 : vector<16x16xf32>
    %26 = math.exp %25 : vector<16x16xf32>
    %cst_16 = arith.constant dense<0.000000e+00> : vector<16xf32>
    %27 = vector.multi_reduction <add>, %26, %cst_16 [1] : vector<16x16xf32> to vector<16xf32>
    %28 = vector.shape_cast %27 : vector<16xf32> to vector<16x1xf32>
    %29 = tpu.reciprocal %28 {approx = true} : vector<16x1xf32> -> vector<16x1xf32>
    %30 = vector.broadcast %29 : vector<16x1xf32> to vector<16x16xf32>
    %31 = arith.mulf %26, %30 : vector<16x16xf32>
    %cst_17 = arith.constant dense<0.000000e+00> : vector<16x16xf32>
    %32 = tpu.matmul %31, %15, %cst_17 {dimension_numbers = #tpu.dot_dimension_numbers<[1], [0], [0], [1], [0, 0, 1, 1], [], []>} : vector<16x16xf32>, vector<16x16xf32>, vector<16x16xf32> -> vector<16x16xf32>
    %33 = vector.extract_strided_slice %12 {offsets = [0, 0], sizes = [16, 32], strides = [1, 1]} : vector<32x32xf32> to vector<16x32xf32>
    %cst_18 = arith.constant dense<0.000000e+00> : vector<16x32xf32>
    %34 = tpu.matmul %32, %33, %cst_18 {dimension_numbers = #tpu.dot_dimension_numbers<[1], [0], [0], [1], [0, 0, 1, 1], [], []>} : vector<16x16xf32>, vector<16x32xf32>, vector<16x32xf32> -> vector<16x32xf32>
    %35 = vector.extract_strided_slice %10 {offsets = [0, 16], sizes = [16, 16], strides = [1, 1]} : vector<16x96xf32> to vector<16x16xf32>
    %36 = vector.extract_strided_slice %10 {offsets = [0, 48], sizes = [16, 16], strides = [1, 1]} : vector<16x96xf32> to vector<16x16xf32>
    %37 = vector.extract_strided_slice %10 {offsets = [0, 80], sizes = [16, 16], strides = [1, 1]} : vector<16x96xf32> to vector<16x16xf32>
    %38 = tpu.transpose %36, [1, 0] : vector<16x16xf32> -> vector<16x16xf32>
    %cst_19 = arith.constant dense<0.000000e+00> : vector<16x16xf32>
    %39 = tpu.matmul %35, %38, %cst_19 {dimension_numbers = #tpu.dot_dimension_numbers<[1], [0], [0], [1], [0, 0, 1, 1], [], []>} : vector<16x16xf32>, vector<16x16xf32>, vector<16x16xf32> -> vector<16x16xf32>
    %cst_20 = arith.constant 2.500000e-01 : f32
    %40 = vector.broadcast %cst_20 : f32 to vector<16x16xf32>
    %41 = arith.mulf %39, %40 : vector<16x16xf32>
    %c0_21 = arith.constant 0 : index
    %c0_22 = arith.constant 0 : index
    %42 = vector.load %arg2[%c0_21, %c0_22] : memref<16x16xf32, #tpu.memory_space<vmem>>, vector<16x16xf32>
    %43 = arith.addf %41, %42 : vector<16x16xf32>
    %cst_23 = arith.constant dense<0xFF800000> : vector<16xf32>
    %44 = vector.multi_reduction <maximumf>, %43, %cst_23 [1] : vector<16x16xf32> to vector<16xf32>
    %45 = vector.shape_cast %44 : vector<16xf32> to vector<16x1xf32>
    %46 = vector.broadcast %45 : vector<16x1xf32> to vector<16x16xf32>
    %47 = arith.subf %43, %46 : vector<16x16xf32>
    %48 = math.exp %47 : vector<16x16xf32>
    %cst_24 = arith.constant dense<0.000000e+00> : vector<16xf32>
    %49 = vector.multi_reduction <add>, %48, %cst_24 [1] : vector<16x16xf32> to vector<16xf32>
    %50 = vector.shape_cast %49 : vector<16xf32> to vector<16x1xf32>
    %51 = tpu.reciprocal %50 {approx = true} : vector<16x1xf32> -> vector<16x1xf32>
    %52 = vector.broadcast %51 : vector<16x1xf32> to vector<16x16xf32>
    %53 = arith.mulf %48, %52 : vector<16x16xf32>
    %cst_25 = arith.constant dense<0.000000e+00> : vector<16x16xf32>
    %54 = tpu.matmul %53, %37, %cst_25 {dimension_numbers = #tpu.dot_dimension_numbers<[1], [0], [0], [1], [0, 0, 1, 1], [], []>} : vector<16x16xf32>, vector<16x16xf32>, vector<16x16xf32> -> vector<16x16xf32>
    %55 = vector.extract_strided_slice %12 {offsets = [16, 0], sizes = [16, 32], strides = [1, 1]} : vector<32x32xf32> to vector<16x32xf32>
    %cst_26 = arith.constant dense<0.000000e+00> : vector<16x32xf32>
    %56 = tpu.matmul %54, %55, %cst_26 {dimension_numbers = #tpu.dot_dimension_numbers<[1], [0], [0], [1], [0, 0, 1, 1], [], []>} : vector<16x16xf32>, vector<16x32xf32>, vector<16x32xf32> -> vector<16x32xf32>
    %57 = arith.addf %34, %56 : vector<16x32xf32>
    %c0_27 = arith.constant 0 : index
    %c0_28 = arith.constant 0 : index
    %c0_29 = arith.constant 0 : index
    %58 = vector.load %arg6[%c0_27, %c0_28, %c0_29] : memref<1x1x32xf32, #tpu.memory_space<vmem>>, vector<1x1x32xf32>
    %59 = vector.shape_cast %58 : vector<1x1x32xf32> to vector<1x32xf32>
    %60 = vector.broadcast %59 : vector<1x32xf32> to vector<16x32xf32>
    %61 = arith.addf %57, %60 : vector<16x32xf32>
    %62 = arith.addf %61, %3 : vector<16x32xf32>
    %c0_30 = arith.constant 0 : index
    %c0_31 = arith.constant 0 : index
    %c0_32 = arith.constant 0 : index
    %63 = vector.load %arg7[%c0_30, %c0_31, %c0_32] : memref<1x1x32xf32, #tpu.memory_space<vmem>>, vector<1x1x32xf32>
    %64 = vector.shape_cast %63 : vector<1x1x32xf32> to vector<1x32xf32>
    %c0_33 = arith.constant 0 : index
    %c0_34 = arith.constant 0 : index
    %c0_35 = arith.constant 0 : index
    %65 = vector.load %arg8[%c0_33, %c0_34, %c0_35] : memref<1x1x32xf32, #tpu.memory_space<vmem>>, vector<1x1x32xf32>
    %66 = vector.shape_cast %65 : vector<1x1x32xf32> to vector<1x32xf32>
    %cst_36 = arith.constant dense<0.000000e+00> : vector<16xf32>
    %67 = vector.multi_reduction <add>, %62, %cst_36 [1] : vector<16x32xf32> to vector<16xf32>
    %68 = vector.shape_cast %67 : vector<16xf32> to vector<16x1xf32>
    %cst_37 = arith.constant 3.200000e+01 : f32
    %69 = vector.broadcast %cst_37 : f32 to vector<16x1xf32>
    %70 = arith.divf %68, %69 : vector<16x1xf32>
    %71 = vector.broadcast %70 : vector<16x1xf32> to vector<16x32xf32>
    %72 = arith.subf %62, %71 : vector<16x32xf32>
    %73 = arith.mulf %72, %72 : vector<16x32xf32>
    %cst_38 = arith.constant dense<0.000000e+00> : vector<16xf32>
    %74 = vector.multi_reduction <add>, %73, %cst_38 [1] : vector<16x32xf32> to vector<16xf32>
    %75 = vector.shape_cast %74 : vector<16xf32> to vector<16x1xf32>
    %cst_39 = arith.constant 3.200000e+01 : f32
    %76 = vector.broadcast %cst_39 : f32 to vector<16x1xf32>
    %77 = arith.divf %75, %76 : vector<16x1xf32>
    %78 = vector.broadcast %70 : vector<16x1xf32> to vector<16x32xf32>
    %79 = arith.subf %62, %78 : vector<16x32xf32>
    %cst_40 = arith.constant 9.99999996E-13 : f32
    %80 = vector.broadcast %cst_40 : f32 to vector<16x1xf32>
    %81 = arith.addf %77, %80 : vector<16x1xf32>
    %82 = math.rsqrt %81 : vector<16x1xf32>
    %83 = vector.broadcast %82 : vector<16x1xf32> to vector<16x32xf32>
    %84 = arith.mulf %79, %83 : vector<16x32xf32>
    %85 = vector.broadcast %64 : vector<1x32xf32> to vector<16x32xf32>
    %86 = arith.mulf %84, %85 : vector<16x32xf32>
    %87 = vector.broadcast %66 : vector<1x32xf32> to vector<16x32xf32>
    %88 = arith.addf %86, %87 : vector<16x32xf32>
    %c0_41 = arith.constant 0 : index
    %c0_42 = arith.constant 0 : index
    %c0_43 = arith.constant 0 : index
    %89 = vector.load %arg9[%c0_41, %c0_42, %c0_43] : memref<1x32x64xf32, #tpu.memory_space<vmem>>, vector<1x32x64xf32>
    %90 = vector.shape_cast %89 : vector<1x32x64xf32> to vector<32x64xf32>
    %cst_44 = arith.constant dense<0.000000e+00> : vector<16x64xf32>
    %91 = tpu.matmul %88, %90, %cst_44 {dimension_numbers = #tpu.dot_dimension_numbers<[1], [0], [0], [1], [0, 0, 1, 1], [], []>} : vector<16x32xf32>, vector<32x64xf32>, vector<16x64xf32> -> vector<16x64xf32>
    %c0_45 = arith.constant 0 : index
    %c0_46 = arith.constant 0 : index
    %c0_47 = arith.constant 0 : index
    %92 = vector.load %arg10[%c0_45, %c0_46, %c0_47] : memref<1x1x64xf32, #tpu.memory_space<vmem>>, vector<1x1x64xf32>
    %93 = vector.shape_cast %92 : vector<1x1x64xf32> to vector<1x64xf32>
    %94 = vector.broadcast %93 : vector<1x64xf32> to vector<16x64xf32>
    %95 = arith.addf %91, %94 : vector<16x64xf32>
    %96 = arith.mulf %95, %95 : vector<16x64xf32>
    %97 = arith.mulf %95, %96 : vector<16x64xf32>
    %cst_48 = arith.constant 4.471500e-02 : f32
    %98 = vector.broadcast %cst_48 : f32 to vector<16x64xf32>
    %99 = arith.mulf %98, %97 : vector<16x64xf32>
    %100 = arith.addf %95, %99 : vector<16x64xf32>
    %cst_49 = arith.constant 0.797884583 : f32
    %101 = vector.broadcast %cst_49 : f32 to vector<16x64xf32>
    %102 = arith.mulf %101, %100 : vector<16x64xf32>
    %103 = math.tanh %102 : vector<16x64xf32>
    %cst_50 = arith.constant 1.000000e+00 : f32
    %104 = vector.broadcast %cst_50 : f32 to vector<16x64xf32>
    %105 = arith.addf %104, %103 : vector<16x64xf32>
    %cst_51 = arith.constant 5.000000e-01 : f32
    %106 = vector.broadcast %cst_51 : f32 to vector<16x64xf32>
    %107 = arith.mulf %106, %105 : vector<16x64xf32>
    %108 = arith.mulf %95, %107 : vector<16x64xf32>
    %c0_52 = arith.constant 0 : index
    %c0_53 = arith.constant 0 : index
    %c0_54 = arith.constant 0 : index
    %109 = vector.load %arg11[%c0_52, %c0_53, %c0_54] : memref<1x64x32xf32, #tpu.memory_space<vmem>>, vector<1x64x32xf32>
    %110 = vector.shape_cast %109 : vector<1x64x32xf32> to vector<64x32xf32>
    %cst_55 = arith.constant dense<0.000000e+00> : vector<16x32xf32>
    %111 = tpu.matmul %108, %110, %cst_55 {dimension_numbers = #tpu.dot_dimension_numbers<[1], [0], [0], [1], [0, 0, 1, 1], [], []>} : vector<16x64xf32>, vector<64x32xf32>, vector<16x32xf32> -> vector<16x32xf32>
    %c0_56 = arith.constant 0 : index
    %c0_57 = arith.constant 0 : index
    %c0_58 = arith.constant 0 : index
    %112 = vector.load %arg12[%c0_56, %c0_57, %c0_58] : memref<1x1x32xf32, #tpu.memory_space<vmem>>, vector<1x1x32xf32>
    %113 = vector.shape_cast %112 : vector<1x1x32xf32> to vector<1x32xf32>
    %114 = vector.broadcast %113 : vector<1x32xf32> to vector<16x32xf32>
    %115 = arith.addf %111, %114 : vector<16x32xf32>
    %116 = arith.addf %115, %88 : vector<16x32xf32>
    %c0_59 = arith.constant 0 : index
    %c0_60 = arith.constant 0 : index
    %c0_61 = arith.constant 0 : index
    %117 = vector.load %arg13[%c0_59, %c0_60, %c0_61] : memref<1x1x32xf32, #tpu.memory_space<vmem>>, vector<1x1x32xf32>
    %118 = vector.shape_cast %117 : vector<1x1x32xf32> to vector<1x32xf32>
    %c0_62 = arith.constant 0 : index
    %c0_63 = arith.constant 0 : index
    %c0_64 = arith.constant 0 : index
    %119 = vector.load %arg14[%c0_62, %c0_63, %c0_64] : memref<1x1x32xf32, #tpu.memory_space<vmem>>, vector<1x1x32xf32>
    %120 = vector.shape_cast %119 : vector<1x1x32xf32> to vector<1x32xf32>
    %cst_65 = arith.constant dense<0.000000e+00> : vector<16xf32>
    %121 = vector.multi_reduction <add>, %116, %cst_65 [1] : vector<16x32xf32> to vector<16xf32>
    %122 = vector.shape_cast %121 : vector<16xf32> to vector<16x1xf32>
    %cst_66 = arith.constant 3.200000e+01 : f32
    %123 = vector.broadcast %cst_66 : f32 to vector<16x1xf32>
    %124 = arith.divf %122, %123 : vector<16x1xf32>
    %125 = vector.broadcast %124 : vector<16x1xf32> to vector<16x32xf32>
    %126 = arith.subf %116, %125 : vector<16x32xf32>
    %127 = arith.mulf %126, %126 : vector<16x32xf32>
    %cst_67 = arith.constant dense<0.000000e+00> : vector<16xf32>
    %128 = vector.multi_reduction <add>, %127, %cst_67 [1] : vector<16x32xf32> to vector<16xf32>
    %129 = vector.shape_cast %128 : vector<16xf32> to vector<16x1xf32>
    %cst_68 = arith.constant 3.200000e+01 : f32
    %130 = vector.broadcast %cst_68 : f32 to vector<16x1xf32>
    %131 = arith.divf %129, %130 : vector<16x1xf32>
    %132 = vector.broadcast %124 : vector<16x1xf32> to vector<16x32xf32>
    %133 = arith.subf %116, %132 : vector<16x32xf32>
    %cst_69 = arith.constant 9.99999996E-13 : f32
    %134 = vector.broadcast %cst_69 : f32 to vector<16x1xf32>
    %135 = arith.addf %131, %134 : vector<16x1xf32>
    %136 = math.rsqrt %135 : vector<16x1xf32>
    %137 = vector.broadcast %136 : vector<16x1xf32> to vector<16x32xf32>
    %138 = arith.mulf %133, %137 : vector<16x32xf32>
    %139 = vector.broadcast %118 : vector<1x32xf32> to vector<16x32xf32>
    %140 = arith.mulf %138, %139 : vector<16x32xf32>
    %141 = vector.broadcast %120 : vector<1x32xf32> to vector<16x32xf32>
    %142 = arith.addf %140, %141 : vector<16x32xf32>
    %c0_70 = arith.constant 0 : index
    %c0_71 = arith.constant 0 : index
    %143 = vector.load %arg16[%c0_70, %c0_71] : memref<16x32xf32, #tpu.memory_space<vmem>>, vector<16x32xf32>
    tpu.vector_store %arg16[%c0_70, %c0_71], %142 {strides = array<i32>} : memref<16x32xf32, #tpu.memory_space<vmem>>, vector<16x32xf32>,
    %c0_72 = arith.constant 0 : index
    %c0_73 = arith.constant 0 : index
    %c0_74 = arith.constant 0 : index
    %144 = vector.load %arg15[%c0_72, %c0_73, %c0_74] : memref<1x16x32xf32, #tpu.memory_space<vmem>>, vector<1x16x32xf32>
    %145 = vector.shape_cast %144 : vector<1x16x32xf32> to vector<16x32xf32>
    %146 = vector.shape_cast %142 : vector<16x32xf32> to vector<1x16x32xf32>
    tpu.vector_store %arg15[%c0_72, %c0_73, %c0_74], %146 {strides = array<i32>} : memref<1x16x32xf32, #tpu.memory_space<vmem>>, vector<1x16x32xf32>,
    return
  }
  func.func @transform_0(%arg0: i32) -> (i32, i32) {
    %c0_i32 = arith.constant 0 : i32
    %c0_i32_0 = arith.constant 0 : i32
    %c0_i32_1 = arith.constant 0 : i32
    return %c0_i32, %c0_i32_0 : i32, i32
  }
  func.func @transform_1(%arg0: i32) -> (i32, i32) {
    %c0_i32 = arith.constant 0 : i32
    %c0_i32_0 = arith.constant 0 : i32
    %c0_i32_1 = arith.constant 0 : i32
    return %c0_i32, %c0_i32_0 : i32, i32
  }
  func.func @transform_2(%arg0: i32) -> (i32, i32, i32) {
    %c0_i32 = arith.constant 0 : i32
    %c0_i32_0 = arith.constant 0 : i32
    %c0_i32_1 = arith.constant 0 : i32
    return %arg0, %c0_i32, %c0_i32_0 : i32, i32, i32
  }
  func.func @transform_3(%arg0: i32) -> (i32, i32, i32) {
    %c0_i32 = arith.constant 0 : i32
    %c0_i32_0 = arith.constant 0 : i32
    %c0_i32_1 = arith.constant 0 : i32
    return %arg0, %c0_i32, %c0_i32_0 : i32, i32, i32
  }
  func.func @transform_4(%arg0: i32) -> (i32, i32, i32) {
    %c0_i32 = arith.constant 0 : i32
    %c0_i32_0 = arith.constant 0 : i32
    %c0_i32_1 = arith.constant 0 : i32
    return %arg0, %c0_i32, %c0_i32_0 : i32, i32, i32
  }
  func.func @transform_5(%arg0: i32) -> (i32, i32, i32) {
    %c0_i32 = arith.constant 0 : i32
    %c0_i32_0 = arith.constant 0 : i32
    %c0_i32_1 = arith.constant 0 : i32
    return %arg0, %c0_i32, %c0_i32_0 : i32, i32, i32
  }
  func.func @transform_6(%arg0: i32) -> (i32, i32, i32) {
    %c0_i32 = arith.constant 0 : i32
    %c0_i32_0 = arith.constant 0 : i32
    %c0_i32_1 = arith.constant 0 : i32
    return %arg0, %c0_i32, %c0_i32_0 : i32, i32, i32
  }
  func.func @transform_7(%arg0: i32) -> (i32, i32, i32) {
    %c0_i32 = arith.constant 0 : i32
    %c0_i32_0 = arith.constant 0 : i32
    %c0_i32_1 = arith.constant 0 : i32
    return %arg0, %c0_i32, %c0_i32_0 : i32, i32, i32
  }
  func.func @transform_8(%arg0: i32) -> (i32, i32, i32) {
    %c0_i32 = arith.constant 0 : i32
    %c0_i32_0 = arith.constant 0 : i32
    %c0_i32_1 = arith.constant 0 : i32
    return %arg0, %c0_i32, %c0_i32_0 : i32, i32, i32
  }
  func.func @transform_9(%arg0: i32) -> (i32, i32, i32) {
    %c0_i32 = arith.constant 0 : i32
    %c0_i32_0 = arith.constant 0 : i32
    %c0_i32_1 = arith.constant 0 : i32
    return %arg0, %c0_i32, %c0_i32_0 : i32, i32, i32
  }
  func.func @transform_10(%arg0: i32) -> (i32, i32, i32) {
    %c0_i32 = arith.constant 0 : i32
    %c0_i32_0 = arith.constant 0 : i32
    %c0_i32_1 = arith.constant 0 : i32
    return %arg0, %c0_i32, %c0_i32_0 : i32, i32, i32
  }
  func.func @transform_11(%arg0: i32) -> (i32, i32, i32) {
    %c0_i32 = arith.constant 0 : i32
    %c0_i32_0 = arith.constant 0 : i32
    %c0_i32_1 = arith.constant 0 : i32
    return %arg0, %c0_i32, %c0_i32_0 : i32, i32, i32
  }
  func.func @transform_12(%arg0: i32) -> (i32, i32, i32) {
    %c0_i32 = arith.constant 0 : i32
    %c0_i32_0 = arith.constant 0 : i32
    %c0_i32_1 = arith.constant 0 : i32
    return %arg0, %c0_i32, %c0_i32_0 : i32, i32, i32
  }
  func.func @transform_13(%arg0: i32) -> (i32, i32, i32) {
    %c0_i32 = arith.constant 0 : i32
    %c0_i32_0 = arith.constant 0 : i32
    %c0_i32_1 = arith.constant 0 : i32
    return %arg0, %c0_i32, %c0_i32_0 : i32, i32, i32
  }
  func.func @transform_14(%arg0: i32) -> (i32, i32, i32) {
    %c0_i32 = arith.constant 0 : i32
    %c0_i32_0 = arith.constant 0 : i32
    %c0_i32_1 = arith.constant 0 : i32
    return %arg0, %c0_i32, %c0_i32_0 : i32, i32, i32
  }
}

module attributes {stable_mosaic.version = 11 : i64} {
  func.func @_head_kernel(%arg0: i32, %arg1: memref<2x32xf32, #tpu.memory_space<vmem>>, %arg2: memref<2x4xf32, #tpu.memory_space<vmem>>, %arg3: memref<32x32xf32, #tpu.memory_space<vmem>>, %arg4: memref<1x32xf32, #tpu.memory_space<vmem>>, %arg5: memref<32x16xf32, #tpu.memory_space<vmem>>, %arg6: memref<4x16xf32, #tpu.memory_space<vmem>>, %arg7: memref<1x16xf32, #tpu.memory_space<vmem>>, %arg8: memref<16x4xf32, #tpu.memory_space<vmem>>, %arg9: memref<1x4xf32, #tpu.memory_space<vmem>>, %arg10: memref<2x4xf32, #tpu.memory_space<vmem>>) attributes {dimension_semantics = [#tpu.dimension_semantics<arbitrary>], iteration_bounds = array<i64: 1>, scalar_prefetch = 0 : i64, scratch_operands = 0 : i64, tpu.core_type = #tpu.core_type<tc>, window_params = [{pipeline_mode = #tpu.pipeline_mode<synchronous>, transform_indices = @transform_0, window_bounds = array<i64: 2, 32>}, {pipeline_mode = #tpu.pipeline_mode<synchronous>, transform_indices = @transform_1, window_bounds = array<i64: 2, 4>}, {pipeline_mode = #tpu.pipeline_mode<synchronous>, transform_indices = @transform_2, window_bounds = array<i64: 32, 32>}, {pipeline_mode = #tpu.pipeline_mode<synchronous>, transform_indices = @transform_3, window_bounds = array<i64: 1, 32>}, {pipeline_mode = #tpu.pipeline_mode<synchronous>, transform_indices = @transform_4, window_bounds = array<i64: 32, 16>}, {pipeline_mode = #tpu.pipeline_mode<synchronous>, transform_indices = @transform_5, window_bounds = array<i64: 4, 16>}, {pipeline_mode = #tpu.pipeline_mode<synchronous>, transform_indices = @transform_6, window_bounds = array<i64: 1, 16>}, {pipeline_mode = #tpu.pipeline_mode<synchronous>, transform_indices = @transform_7, window_bounds = array<i64: 16, 4>}, {pipeline_mode = #tpu.pipeline_mode<synchronous>, transform_indices = @transform_8, window_bounds = array<i64: 1, 4>}, {pipeline_mode = #tpu.pipeline_mode<synchronous>, transform_indices = @transform_9, window_bounds = array<i64: 2, 4>}]} {
    %c0 = arith.constant 0 : index
    %c0_0 = arith.constant 0 : index
    %0 = vector.load %arg1[%c0, %c0_0] : memref<2x32xf32, #tpu.memory_space<vmem>>, vector<2x32xf32>
    %c0_1 = arith.constant 0 : index
    %c0_2 = arith.constant 0 : index
    %1 = vector.load %arg3[%c0_1, %c0_2] : memref<32x32xf32, #tpu.memory_space<vmem>>, vector<32x32xf32>
    %cst = arith.constant dense<0.000000e+00> : vector<2x32xf32>
    %2 = tpu.matmul %0, %1, %cst {dimension_numbers = #tpu.dot_dimension_numbers<[1], [0], [0], [1], [0, 0, 1, 1], [], []>} : vector<2x32xf32>, vector<32x32xf32>, vector<2x32xf32> -> vector<2x32xf32>
    %c0_3 = arith.constant 0 : index
    %c0_4 = arith.constant 0 : index
    %3 = vector.load %arg4[%c0_3, %c0_4] : memref<1x32xf32, #tpu.memory_space<vmem>>, vector<1x32xf32>
    %4 = vector.broadcast %3 : vector<1x32xf32> to vector<2x32xf32>
    %5 = arith.addf %2, %4 : vector<2x32xf32>
    %6 = math.tanh %5 : vector<2x32xf32>
    %c0_5 = arith.constant 0 : index
    %c0_6 = arith.constant 0 : index
    %7 = vector.load %arg5[%c0_5, %c0_6] : memref<32x16xf32, #tpu.memory_space<vmem>>, vector<32x16xf32>
    %cst_7 = arith.constant dense<0.000000e+00> : vector<2x16xf32>
    %8 = tpu.matmul %6, %7, %cst_7 {dimension_numbers = #tpu.dot_dimension_numbers<[1], [0], [0], [1], [0, 0, 1, 1], [], []>} : vector<2x32xf32>, vector<32x16xf32>, vector<2x16xf32> -> vector<2x16xf32>
    %c0_8 = arith.constant 0 : index
    %c0_9 = arith.constant 0 : index
    %9 = vector.load %arg2[%c0_8, %c0_9] : memref<2x4xf32, #tpu.memory_space<vmem>>, vector<2x4xf32>
    %c0_10 = arith.constant 0 : index
    %c0_11 = arith.constant 0 : index
    %10 = vector.load %arg6[%c0_10, %c0_11] : memref<4x16xf32, #tpu.memory_space<vmem>>, vector<4x16xf32>
    %cst_12 = arith.constant dense<0.000000e+00> : vector<2x16xf32>
    %11 = tpu.matmul %9, %10, %cst_12 {dimension_numbers = #tpu.dot_dimension_numbers<[1], [0], [0], [1], [0, 0, 1, 1], [], []>} : vector<2x4xf32>, vector<4x16xf32>, vector<2x16xf32> -> vector<2x16xf32>
    %12 = arith.addf %8, %11 : vector<2x16xf32>
    %c0_13 = arith.constant 0 : index
    %c0_14 = arith.constant 0 : index
    %13 = vector.load %arg7[%c0_13, %c0_14] : memref<1x16xf32, #tpu.memory_space<vmem>>, vector<1x16xf32>
    %14 = vector.broadcast %13 : vector<1x16xf32> to vector<2x16xf32>
    %15 = arith.addf %12, %14 : vector<2x16xf32>
    %16 = math.tanh %15 : vector<2x16xf32>
    %c0_15 = arith.constant 0 : index
    %c0_16 = arith.constant 0 : index
    %17 = vector.load %arg8[%c0_15, %c0_16] : memref<16x4xf32, #tpu.memory_space<vmem>>, vector<16x4xf32>
    %cst_17 = arith.constant dense<0.000000e+00> : vector<2x4xf32>
    %18 = tpu.matmul %16, %17, %cst_17 {dimension_numbers = #tpu.dot_dimension_numbers<[1], [0], [0], [1], [0, 0, 1, 1], [], []>} : vector<2x16xf32>, vector<16x4xf32>, vector<2x4xf32> -> vector<2x4xf32>
    %c0_18 = arith.constant 0 : index
    %c0_19 = arith.constant 0 : index
    %19 = vector.load %arg9[%c0_18, %c0_19] : memref<1x4xf32, #tpu.memory_space<vmem>>, vector<1x4xf32>
    %20 = vector.broadcast %19 : vector<1x4xf32> to vector<2x4xf32>
    %21 = arith.addf %18, %20 : vector<2x4xf32>
    %c0_20 = arith.constant 0 : index
    %c0_21 = arith.constant 0 : index
    %22 = vector.load %arg10[%c0_20, %c0_21] : memref<2x4xf32, #tpu.memory_space<vmem>>, vector<2x4xf32>
    tpu.vector_store %arg10[%c0_20, %c0_21], %21 {strides = array<i32>} : memref<2x4xf32, #tpu.memory_space<vmem>>, vector<2x4xf32>,
    return
  }
  func.func @transform_0(%arg0: i32) -> (i32, i32) {
    %c0_i32 = arith.constant 0 : i32
    %c0_i32_0 = arith.constant 0 : i32
    %c0_i32_1 = arith.constant 0 : i32
    return %c0_i32, %c0_i32_0 : i32, i32
  }
  func.func @transform_1(%arg0: i32) -> (i32, i32) {
    %c0_i32 = arith.constant 0 : i32
    %c0_i32_0 = arith.constant 0 : i32
    %c0_i32_1 = arith.constant 0 : i32
    return %c0_i32, %c0_i32_0 : i32, i32
  }
  func.func @transform_2(%arg0: i32) -> (i32, i32) {
    %c0_i32 = arith.constant 0 : i32
    %c0_i32_0 = arith.constant 0 : i32
    %c0_i32_1 = arith.constant 0 : i32
    return %c0_i32, %c0_i32_0 : i32, i32
  }
  func.func @transform_3(%arg0: i32) -> (i32, i32) {
    %c0_i32 = arith.constant 0 : i32
    %c0_i32_0 = arith.constant 0 : i32
    %c0_i32_1 = arith.constant 0 : i32
    return %c0_i32, %c0_i32_0 : i32, i32
  }
  func.func @transform_4(%arg0: i32) -> (i32, i32) {
    %c0_i32 = arith.constant 0 : i32
    %c0_i32_0 = arith.constant 0 : i32
    %c0_i32_1 = arith.constant 0 : i32
    return %c0_i32, %c0_i32_0 : i32, i32
  }
  func.func @transform_5(%arg0: i32) -> (i32, i32) {
    %c0_i32 = arith.constant 0 : i32
    %c0_i32_0 = arith.constant 0 : i32
    %c0_i32_1 = arith.constant 0 : i32
    return %c0_i32, %c0_i32_0 : i32, i32
  }
  func.func @transform_6(%arg0: i32) -> (i32, i32) {
    %c0_i32 = arith.constant 0 : i32
    %c0_i32_0 = arith.constant 0 : i32
    %c0_i32_1 = arith.constant 0 : i32
    return %c0_i32, %c0_i32_0 : i32, i32
  }
  func.func @transform_7(%arg0: i32) -> (i32, i32) {
    %c0_i32 = arith.constant 0 : i32
    %c0_i32_0 = arith.constant 0 : i32
    %c0_i32_1 = arith.constant 0 : i32
    return %c0_i32, %c0_i32_0 : i32, i32
  }
  func.func @transform_8(%arg0: i32) -> (i32, i32) {
    %c0_i32 = arith.constant 0 : i32
    %c0_i32_0 = arith.constant 0 : i32
    %c0_i32_1 = arith.constant 0 : i32
    return %c0_i32, %c0_i32_0 : i32, i32
  }
  func.func @transform_9(%arg0: i32) -> (i32, i32) {
    %c0_i32 = arith.constant 0 : i32
    %c0_i32_0 = arith.constant 0 : i32
    %c0_i32_1 = arith.constant 0 : i32
    return %c0_i32, %c0_i32_0 : i32, i32
  }
}

</mosaic_0001>

<llo_original>
// kernel: custom_bert_forward.3
$region0: #{custom_bert_forward.3}
  #allocation0 [shape = 'u32[]', space=smem, size = 0x4, offset = 0x4, fixed_abs, tag = 'smem constant byte address 0x4 - core index']
  #allocation1 [shape = 'u32[144,128]{1,0:T(1,128)}', space=vmem, size = 0x12000, scoped, tag = 'internal scratch']
  %s0 = inlined_call_operand.vmem [shape: f32[16,32], index: 0, kind: input, shape index: {}]
  %s1 = inlined_call_operand.vmem [shape: f32[1,32], index: 1, kind: input, shape index: {}]
  %s2 = inlined_call_operand.vmem [shape: f32[1,32], index: 2, kind: input, shape index: {}]
  %s3 = inlined_call_operand.vmem [shape: f32[16,32], index: 3, kind: output, shape index: {}]
  %s4 = sld [smem:[#allocation0]]
  $region22: #{custom_bert_forward.3} parent=0
    _
  %s6 = ssub.s32 1, %s4
  %s7 = scalar_select 0, %s6, %s4
  // Predicated region
  $region2: #{custom_bert_forward.3} parent=0 // pred_check
    _
  $region3: #{custom_bert_forward.3} parent=0 // pred_check_branch
    %9 = sbr.rel (0) target = $region5
  $region4: #{custom_bert_forward.3} parent=0 // pred_region
    _
  $region5: #{custom_bert_forward.3} parent=0 // pred_fallthru
    _
  // Predicated region
  $region6: #{custom_bert_forward.3} parent=0 // pred_check
    _
  $region7: #{custom_bert_forward.3} parent=0 // pred_check_branch
    %11 = sbr.rel (0) target = $region9
  $region8: #{custom_bert_forward.3} parent=0 // pred_region
    _
  $region9: #{custom_bert_forward.3} parent=0 // pred_fallthru
    _
  // Predicated region
  $region10: #{custom_bert_forward.3} parent=0 // pred_check
    _
  $region11: #{custom_bert_forward.3} parent=0 // pred_check_branch
    %13 = sbr.rel (0) target = $region13
  $region12: #{custom_bert_forward.3} parent=0 // pred_region
    _
  $region13: #{custom_bert_forward.3} parent=0 // pred_fallthru
    _
  %v14 = vld [vmem:[%s0] sm:$0xff]
  %v15 = vld [vmem:[%s0 + $0x8] sm:$0xff]
  %v16 = vld [vmem:[%s1] sm:$0x1]
  %v17 = vld [vmem:[%s2] sm:$0x1]
  %vm18 = vcmask 261120
  %v19 = vsel %vm18, %v14, 0.0
  %20 = vadd.xlane.f32.xlu0 %v19
  %v21 = vpop.xlane.xlu0 %20
  %v22 = vsel %vm18, %v15, 0.0
  %23 = vadd.xlane.f32.xlu0 %v22
  %v24 = vpop.xlane.xlu0 %23
  %v25 = vrcp.pop 32.0
  %v26 = vmul.f32 %v21, %v25
  %v27 = vmul.f32 %v24, %v25
  %v28 = vsub.f32 %v14, %v26
  %v29 = vsub.f32 %v15, %v27
  %v30 = vmul.f32 %v28, %v28
  %v31 = vmul.f32 %v29, %v29
  %v32 = vsel %vm18, %v30, 0.0
  %33 = vadd.xlane.f32.xlu0 %v32
  %v34 = vpop.xlane.xlu0 %33
  %v35 = vsel %vm18, %v31, 0.0
  %36 = vadd.xlane.f32.xlu0 %v35
  %v37 = vpop.xlane.xlu0 %36
  %v38 = vmul.f32 %v34, %v25
  %v39 = vmul.f32 %v37, %v25
  %v40 = vadd.f32 %v38, 1e-12
  %v41 = vadd.f32 %v39, 1e-12
  %v42 = vrsqrt.pop %v40
  %v43 = vrsqrt.pop %v41
  %v44 = vmul.f32 %v28, %v42
  %v45 = vmul.f32 %v29, %v43
  %v47 = vlaneseq
  %v48 = vshrl.u32 %v47, 7
  %v49 = vsub.s32 0, %v48
  %v50 = vrot.slane %v16, %v49
  %v52 = vmul.f32 %v44, %v50
  %v53 = vmul.f32 %v45, %v50
  %v55 = vlaneseq
  %v56 = vshrl.u32 %v55, 7
  %v57 = vsub.s32 0, %v56
  %v58 = vrot.slane %v17, %v57
  %v60 = vadd.f32 %v52, %v58
  %v61 = vadd.f32 %v53, %v58
  %62 = vst.msk [vmem:[%s3] sm:$0xff] %vm18, %v60
  %63 = vst.msk [vmem:[%s3 + $0x8] sm:$0xff] %vm18, %v61
  // Predicated region
  $region14: #{custom_bert_forward.3} parent=0 // pred_check
    _
  $region15: #{custom_bert_forward.3} parent=0 // pred_check_branch
    %65 = sbr.rel (0) target = $region17
  $region16: #{custom_bert_forward.3} parent=0 // pred_region
    _
  $region17: #{custom_bert_forward.3} parent=0 // pred_fallthru
    _
  // Predicated region
  $region18: #{custom_bert_forward.3} parent=0 // pred_check
    _
  $region19: #{custom_bert_forward.3} parent=0 // pred_check_branch
    %67 = sbr.rel (0) target = $region21
  $region20: #{custom_bert_forward.3} parent=0 // pred_region
    _
  $region21: #{custom_bert_forward.3} parent=0 // pred_fallthru
    _

// kernel: custom_bert_forward.4
$region0: #{custom_bert_forward.4}
  #allocation0 [shape = 'u32[]', space=smem, size = 0x4, offset = 0x4, fixed_abs, tag = 'smem constant byte address 0x4 - core index']
  #allocation1 [shape = 'u32[144,128]{1,0:T(1,128)}', space=vmem, size = 0x12000, scoped, tag = 'internal scratch']
  #allocation2 [shape = 'f32[16,32]{1,0:T(8,128)}', space=vmem, size = 0x2000, scoped, tag = 'scratch operand']
  %s0 = inlined_call_operand.vmem [shape: f32[16,32], index: 0, kind: input, shape index: {}]
  %s1 = inlined_call_operand.vmem [shape: f32[16,16], index: 1, kind: input, shape index: {}]
  %s2 = inlined_call_operand.vmem [shape: f32[2,32,96], index: 2, kind: input, shape index: {}]
  %s3 = inlined_call_operand.vmem [shape: f32[2,1,96], index: 3, kind: input, shape index: {}]
  %s4 = inlined_call_operand.vmem [shape: f32[2,32,32], index: 4, kind: input, shape index: {}]
  %s5 = inlined_call_operand.vmem [shape: f32[2,1,32], index: 5, kind: input, shape index: {}]
  %s6 = inlined_call_operand.vmem [shape: f32[2,1,32], index: 6, kind: input, shape index: {}]
  %s7 = inlined_call_operand.vmem [shape: f32[2,1,32], index: 7, kind: input, shape index: {}]
  %s8 = inlined_call_operand.vmem [shape: f32[2,32,64], index: 8, kind: input, shape index: {}]
  %s9 = inlined_call_operand.vmem [shape: f32[2,1,64], index: 9, kind: input, shape index: {}]
  %s10 = inlined_call_operand.vmem [shape: f32[2,64,32], index: 10, kind: input, shape index: {}]
  %s11 = inlined_call_operand.vmem [shape: f32[2,1,32], index: 11, kind: input, shape index: {}]
  %s12 = inlined_call_operand.vmem [shape: f32[2,1,32], index: 12, kind: input, shape index: {}]
  %s13 = inlined_call_operand.vmem [shape: f32[2,1,32], index: 13, kind: input, shape index: {}]
  %s14 = inlined_call_operand.vmem [shape: f32[2,16,32], index: 14, kind: output, shape index: {}]
  %s15 = sld [smem:[#allocation0]]
  $region93: #{custom_bert_forward.4} parent=0
    _
  %s17 = ssub.s32 1, %s15
  %s18 = scalar_select 0, %s17, %s15
  loop: start=0, step=1, limit=4
  $region2: #{custom_bert_forward.4} parent=0 // loop_pre_header
    _
  $region3: #{custom_bert_forward.4} parent=0 // loop_header
    %s20 = sphi 0, %s24
    %p21 = scmp.ge.s32.totalorder %s20, 4
    %s28 = sphi 0, %s28
    %s30 = sphi 0, %s28
    %s31 = sphi 0, %s30
    %s45 = sphi 0, %s31
    %s49 = sphi 0, %s49
    %s51 = sphi 0, %s49
    %s52 = sphi 0, %s51
    %s66 = sphi 0, %s52
    %s72 = sphi 0, %s74
    %s75 = sphi 0, %s72
    %s76 = sphi 0, %s75
    %s92 = sphi 0, %s76
    %s98 = sphi 0, %s100
    %s101 = sphi 0, %s98
    %s102 = sphi 0, %s101
    %s118 = sphi 0, %s102
    %s124 = sphi 0, %s126
    %s127 = sphi 0, %s124
    %s128 = sphi 0, %s127
    %s144 = sphi 0, %s128
    %s150 = sphi 0, %s152
    %s153 = sphi 0, %s150
    %s154 = sphi 0, %s153
    %s170 = sphi 0, %s154
    %s176 = sphi 0, %s178
    %s179 = sphi 0, %s176
    %s180 = sphi 0, %s179
    %s196 = sphi 0, %s180
    %s202 = sphi 0, %s204
    %s205 = sphi 0, %s202
    %s206 = sphi 0, %s205
    %s222 = sphi 0, %s206
    %s228 = sphi 0, %s230
    %s231 = sphi 0, %s228
    %s232 = sphi 0, %s231
    %s248 = sphi 0, %s232
    %s254 = sphi 0, %s256
    %s257 = sphi 0, %s254
    %s258 = sphi 0, %s257
    %s274 = sphi 0, %s258
    %s280 = sphi 0, %s282
    %s283 = sphi 0, %s280
    %s284 = sphi 0, %s283
    %s300 = sphi 0, %s284
    %s306 = sphi 0, %s308
    %s309 = sphi 0, %s306
    %s310 = sphi 0, %s309
    %s326 = sphi 0, %s310
    %s332 = sphi 0, %s334
    %s335 = sphi 0, %s332
    %s336 = sphi 0, %s335
    %s352 = sphi 0, %s336
    %s358 = sphi 0, %s360
    %s361 = sphi 0, %s358
    %s362 = sphi 0, %s361
    %s378 = sphi 0, %s362
    %s384 = sphi 0, %s386
    %s387 = sphi 0, %s384
    %s388 = sphi 0, %s387
    %s404 = sphi 0, %s388
  $region4: #{custom_bert_forward.4} parent=0 // loop_header_branch
    %23 = sbr.rel (%p21) target = $region8
  $region5: #{custom_bert_forward.4} parent=0 // loop_body
    %s25 = ssub.s32 %s20, 1
    %s26 = ssub.s32 %s20, 2
    %s27 = sadd.s32 %s20, 1
    %s29 = sadd.s32 %s28, 1
    %p32 = scmp.eq.s32.totalorder %s20, 1
    %p33 = scmp.ne.s32.totalorder %s28, %s30
    %p34 = scmp.eq.s32.totalorder %s20, 0
    %p35 = por %p33, %p34
    %p36 = scmp.ne.s32.totalorder %s28, %s30
    %p37 = scmp.eq.s32.totalorder %s25, 1
    %p38 = por %p36, %p37
    %p39 = scmp.ne.s32.totalorder %s30, %s31
    %p40 = scmp.eq.s32.totalorder %s25, 0
    %p41 = por %p39, %p40
    %p42 = scmp.ne.s32.totalorder %s30, %s31
    %p43 = scmp.eq.s32.totalorder %s26, 1
    %p44 = por %p42, %p43
    %p46 = scmp.ne.s32.totalorder %s31, %s45
    %p47 = scmp.eq.s32.totalorder %s26, 0
    %p48 = por %p46, %p47
    %s50 = sadd.s32 %s49, 1
    %p53 = scmp.eq.s32.totalorder %s20, 1
    %p54 = scmp.ne.s32.totalorder %s49, %s51
    %p55 = scmp.eq.s32.totalorder %s20, 0
    %p56 = por %p54, %p55
    %p57 = scmp.ne.s32.totalorder %s49, %s51
    %p58 = scmp.eq.s32.totalorder %s25, 1
    %p59 = por %p57, %p58
    %p60 = scmp.ne.s32.totalorder %s51, %s52
    %p61 = scmp.eq.s32.totalorder %s25, 0
    %p62 = por %p60, %p61
    %p63 = scmp.ne.s32.totalorder %s51, %s52
    %p64 = scmp.eq.s32.totalorder %s26, 1
    %p65 = por %p63, %p64
    %p67 = scmp.ne.s32.totalorder %s52, %s66
    %p68 = scmp.eq.s32.totalorder %s26, 0
    %p69 = por %p67, %p68
    %s70 = ssub.s32 %s20, %s27
    %p71 = scmp.eq.s32.totalorder %s70, 0
    %s73 = sadd.s32 %s72, 1
    %s74 = scalar_select %p71, %s72, %s73
    %p77 = pneg %p71
    %p78 = scmp.eq.s32.totalorder %s20, 1
    %p79 = por %p77, %p78
    %p80 = scmp.ne.s32.totalorder %s72, %s75
    %p81 = scmp.eq.s32.totalorder %s20, 0
    %p82 = por %p80, %p81
    %p83 = scmp.ne.s32.totalorder %s72, %s75
    %p84 = scmp.eq.s32.totalorder %s25, 1
    %p85 = por %p83, %p84
    %p86 = scmp.ne.s32.totalorder %s75, %s76
    %p87 = scmp.eq.s32.totalorder %s25, 0
    %p88 = por %p86, %p87
    %p89 = scmp.ne.s32.totalorder %s75, %s76
    %p90 = scmp.eq.s32.totalorder %s26, 1
    %p91 = por %p89, %p90
    %p93 = scmp.ne.s32.totalorder %s76, %s92
    %p94 = scmp.eq.s32.totalorder %s26, 0
    %p95 = por %p93, %p94
    %s96 = ssub.s32 %s20, %s27
    %p97 = scmp.eq.s32.totalorder %s96, 0
    %s99 = sadd.s32 %s98, 1
    %s100 = scalar_select %p97, %s98, %s99
    %p103 = pneg %p97
    %p104 = scmp.eq.s32.totalorder %s20, 1
    %p105 = por %p103, %p104
    %p106 = scmp.ne.s32.totalorder %s98, %s101
    %p107 = scmp.eq.s32.totalorder %s20, 0
    %p108 = por %p106, %p107
    %p109 = scmp.ne.s32.totalorder %s98, %s101
    %p110 = scmp.eq.s32.totalorder %s25, 1
    %p111 = por %p109, %p110
    %p112 = scmp.ne.s32.totalorder %s101, %s102
    %p113 = scmp.eq.s32.totalorder %s25, 0
    %p114 = por %p112, %p113
    %p115 = scmp.ne.s32.totalorder %s101, %s102
    %p116 = scmp.eq.s32.totalorder %s26, 1
    %p117 = por %p115, %p116
    %p119 = scmp.ne.s32.totalorder %s102, %s118
    %p120 = scmp.eq.s32.totalorder %s26, 0
    %p121 = por %p119, %p120
    %s122 = ssub.s32 %s20, %s27
    %p123 = scmp.eq.s32.totalorder %s122, 0
    %s125 = sadd.s32 %s124, 1
    %s126 = scalar_select %p123, %s124, %s125
    %p129 = pneg %p123
    %p130 = scmp.eq.s32.totalorder %s20, 1
    %p131 = por %p129, %p130
    %p132 = scmp.ne.s32.totalorder %s124, %s127
    %p133 = scmp.eq.s32.totalorder %s20, 0
    %p134 = por %p132, %p133
    %p135 = scmp.ne.s32.totalorder %s124, %s127
    %p136 = scmp.eq.s32.totalorder %s25, 1
    %p137 = por %p135, %p136
    %p138 = scmp.ne.s32.totalorder %s127, %s128
    %p139 = scmp.eq.s32.totalorder %s25, 0
    %p140 = por %p138, %p139
    %p141 = scmp.ne.s32.totalorder %s127, %s128
    %p142 = scmp.eq.s32.totalorder %s26, 1
    %p143 = por %p141, %p142
    %p145 = scmp.ne.s32.totalorder %s128, %s144
    %p146 = scmp.eq.s32.totalorder %s26, 0
    %p147 = por %p145, %p146
    %s148 = ssub.s32 %s20, %s27
    %p149 = scmp.eq.s32.totalorder %s148, 0
    %s151 = sadd.s32 %s150, 1
    %s152 = scalar_select %p149, %s150, %s151
    %p155 = pneg %p149
    %p156 = scmp.eq.s32.totalorder %s20, 1
    %p157 = por %p155, %p156
    %p158 = scmp.ne.s32.totalorder %s150, %s153
    %p159 = scmp.eq.s32.totalorder %s20, 0
    %p160 = por %p158, %p159
    %p161 = scmp.ne.s32.totalorder %s150, %s153
    %p162 = scmp.eq.s32.totalorder %s25, 1
    %p163 = por %p161, %p162
    %p164 = scmp.ne.s32.totalorder %s153, %s154
    %p165 = scmp.eq.s32.totalorder %s25, 0
    %p166 = por %p164, %p165
    %p167 = scmp.ne.s32.totalorder %s153, %s154
    %p168 = scmp.eq.s32.totalorder %s26, 1
    %p169 = por %p167, %p168
    %p171 = scmp.ne.s32.totalorder %s154, %s170
    %p172 = scmp.eq.s32.totalorder %s26, 0
    %p173 = por %p171, %p172
    %s174 = ssub.s32 %s20, %s27
    %p175 = scmp.eq.s32.totalorder %s174, 0
    %s177 = sadd.s32 %s176, 1
    %s178 = scalar_select %p175, %s176, %s177
    %p181 = pneg %p175
    %p182 = scmp.eq.s32.totalorder %s20, 1
    %p183 = por %p181, %p182
    %p184 = scmp.ne.s32.totalorder %s176, %s179
    %p185 = scmp.eq.s32.totalorder %s20, 0
    %p186 = por %p184, %p185
    %p187 = scmp.ne.s32.totalorder %s176, %s179
    %p188 = scmp.eq.s32.totalorder %s25, 1
    %p189 = por %p187, %p188
    %p190 = scmp.ne.s32.totalorder %s179, %s180
    %p191 = scmp.eq.s32.totalorder %s25, 0
    %p192 = por %p190, %p191
    %p193 = scmp.ne.s32.totalorder %s179, %s180
    %p194 = scmp.eq.s32.totalorder %s26, 1
    %p195 = por %p193, %p194
    %p197 = scmp.ne.s32.totalorder %s180, %s196
    %p198 = scmp.eq.s32.totalorder %s26, 0
    %p199 = por %p197, %p198
    %s200 = ssub.s32 %s20, %s27
    %p201 = scmp.eq.s32.totalorder %s200, 0
    %s203 = sadd.s32 %s202, 1
    %s204 = scalar_select %p201, %s202, %s203
    %p207 = pneg %p201
    %p208 = scmp.eq.s32.totalorder %s20, 1
    %p209 = por %p207, %p208
    %p210 = scmp.ne.s32.totalorder %s202, %s205
    %p211 = scmp.eq.s32.totalorder %s20, 0
    %p212 = por %p210, %p211
    %p213 = scmp.ne.s32.totalorder %s202, %s205
    %p214 = scmp.eq.s32.totalorder %s25, 1
    %p215 = por %p213, %p214
    %p216 = scmp.ne.s32.totalorder %s205, %s206
    %p217 = scmp.eq.s32.totalorder %s25, 0
    %p218 = por %p216, %p217
    %p219 = scmp.ne.s32.totalorder %s205, %s206
    %p220 = scmp.eq.s32.totalorder %s26, 1
    %p221 = por %p219, %p220
    %p223 = scmp.ne.s32.totalorder %s206, %s222
    %p224 = scmp.eq.s32.totalorder %s26, 0
    %p225 = por %p223, %p224
    %s226 = ssub.s32 %s20, %s27
    %p227 = scmp.eq.s32.totalorder %s226, 0
    %s229 = sadd.s32 %s228, 1
    %s230 = scalar_select %p227, %s228, %s229
    %p233 = pneg %p227
    %p234 = scmp.eq.s32.totalorder %s20, 1
    %p235 = por %p233, %p234
    %p236 = scmp.ne.s32.totalorder %s228, %s231
    %p237 = scmp.eq.s32.totalorder %s20, 0
    %p238 = por %p236, %p237
    %p239 = scmp.ne.s32.totalorder %s228, %s231
    %p240 = scmp.eq.s32.totalorder %s25, 1
    %p241 = por %p239, %p240
    %p242 = scmp.ne.s32.totalorder %s231, %s232
    %p243 = scmp.eq.s32.totalorder %s25, 0
    %p244 = por %p242, %p243
    %p245 = scmp.ne.s32.totalorder %s231, %s232
    %p246 = scmp.eq.s32.totalorder %s26, 1
    %p247 = por %p245, %p246
    %p249 = scmp.ne.s32.totalorder %s232, %s248
    %p250 = scmp.eq.s32.totalorder %s26, 0
    %p251 = por %p249, %p250
    %s252 = ssub.s32 %s20, %s27
    %p253 = scmp.eq.s32.totalorder %s252, 0
    %s255 = sadd.s32 %s254, 1
    %s256 = scalar_select %p253, %s254, %s255
    %p259 = pneg %p253
    %p260 = scmp.eq.s32.totalorder %s20, 1
    %p261 = por %p259, %p260
    %p262 = scmp.ne.s32.totalorder %s254, %s257
    %p263 = scmp.eq.s32.totalorder %s20, 0
    %p264 = por %p262, %p263
    %p265 = scmp.ne.s32.totalorder %s254, %s257
    %p266 = scmp.eq.s32.totalorder %s25, 1
    %p267 = por %p265, %p266
    %p268 = scmp.ne.s32.totalorder %s257, %s258
    %p269 = scmp.eq.s32.totalorder %s25, 0
    %p270 = por %p268, %p269
    %p271 = scmp.ne.s32.totalorder %s257, %s258
    %p272 = scmp.eq.s32.totalorder %s26, 1
    %p273 = por %p271, %p272
    %p275 = scmp.ne.s32.totalorder %s258, %s274
    %p276 = scmp.eq.s32.totalorder %s26, 0
    %p277 = por %p275, %p276
    %s278 = ssub.s32 %s20, %s27
    %p279 = scmp.eq.s32.totalorder %s278, 0
    %s281 = sadd.s32 %s280, 1
    %s282 = scalar_select %p279, %s280, %s281
    %p285 = pneg %p279
    %p286 = scmp.eq.s32.totalorder %s20, 1
    %p287 = por %p285, %p286
    %p288 = scmp.ne.s32.totalorder %s280, %s283
    %p289 = scmp.eq.s32.totalorder %s20, 0
    %p290 = por %p288, %p289
    %p291 = scmp.ne.s32.totalorder %s280, %s283
    %p292 = scmp.eq.s32.totalorder %s25, 1
    %p293 = por %p291, %p292
    %p294 = scmp.ne.s32.totalorder %s283, %s284
    %p295 = scmp.eq.s32.totalorder %s25, 0
    %p296 = por %p294, %p295
    %p297 = scmp.ne.s32.totalorder %s283, %s284
    %p298 = scmp.eq.s32.totalorder %s26, 1
    %p299 = por %p297, %p298
    %p301 = scmp.ne.s32.totalorder %s284, %s300
    %p302 = scmp.eq.s32.totalorder %s26, 0
    %p303 = por %p301, %p302
    %s304 = ssub.s32 %s20, %s27
    %p305 = scmp.eq.s32.totalorder %s304, 0
    %s307 = sadd.s32 %s306, 1
    %s308 = scalar_select %p305, %s306, %s307
    %p311 = pneg %p305
    %p312 = scmp.eq.s32.totalorder %s20, 1
    %p313 = por %p311, %p312
    %p314 = scmp.ne.s32.totalorder %s306, %s309
    %p315 = scmp.eq.s32.totalorder %s20, 0
    %p316 = por %p314, %p315
    %p317 = scmp.ne.s32.totalorder %s306, %s309
    %p318 = scmp.eq.s32.totalorder %s25, 1
    %p319 = por %p317, %p318
    %p320 = scmp.ne.s32.totalorder %s309, %s310
    %p321 = scmp.eq.s32.totalorder %s25, 0
    %p322 = por %p320, %p321
    %p323 = scmp.ne.s32.totalorder %s309, %s310
    %p324 = scmp.eq.s32.totalorder %s26, 1
    %p325 = por %p323, %p324
    %p327 = scmp.ne.s32.totalorder %s310, %s326
    %p328 = scmp.eq.s32.totalorder %s26, 0
    %p329 = por %p327, %p328
    %s330 = ssub.s32 %s20, %s27
    %p331 = scmp.eq.s32.totalorder %s330, 0
    %s333 = sadd.s32 %s332, 1
    %s334 = scalar_select %p331, %s332, %s333
    %p337 = pneg %p331
    %p338 = scmp.eq.s32.totalorder %s20, 1
    %p339 = por %p337, %p338
    %p340 = scmp.ne.s32.totalorder %s332, %s335
    %p341 = scmp.eq.s32.totalorder %s20, 0
    %p342 = por %p340, %p341
    %p343 = scmp.ne.s32.totalorder %s332, %s335
    %p344 = scmp.eq.s32.totalorder %s25, 1
    %p345 = por %p343, %p344
    %p346 = scmp.ne.s32.totalorder %s335, %s336
    %p347 = scmp.eq.s32.totalorder %s25, 0
    %p348 = por %p346, %p347
    %p349 = scmp.ne.s32.totalorder %s335, %s336
    %p350 = scmp.eq.s32.totalorder %s26, 1
    %p351 = por %p349, %p350
    %p353 = scmp.ne.s32.totalorder %s336, %s352
    %p354 = scmp.eq.s32.totalorder %s26, 0
    %p355 = por %p353, %p354
    %s356 = ssub.s32 %s20, %s27
    %p357 = scmp.eq.s32.totalorder %s356, 0
    %s359 = sadd.s32 %s358, 1
    %s360 = scalar_select %p357, %s358, %s359
    %p363 = pneg %p357
    %p364 = scmp.eq.s32.totalorder %s20, 1
    %p365 = por %p363, %p364
    %p366 = scmp.ne.s32.totalorder %s358, %s361
    %p367 = scmp.eq.s32.totalorder %s20, 0
    %p368 = por %p366, %p367
    %p369 = scmp.ne.s32.totalorder %s358, %s361
    %p370 = scmp.eq.s32.totalorder %s25, 1
    %p371 = por %p369, %p370
    %p372 = scmp.ne.s32.totalorder %s361, %s362
    %p373 = scmp.eq.s32.totalorder %s25, 0
    %p374 = por %p372, %p373
    %p375 = scmp.ne.s32.totalorder %s361, %s362
    %p376 = scmp.eq.s32.totalorder %s26, 1
    %p377 = por %p375, %p376
    %p379 = scmp.ne.s32.totalorder %s362, %s378
    %p380 = scmp.eq.s32.totalorder %s26, 0
    %p381 = por %p379, %p380
    %s382 = ssub.s32 %s20, %s27
    %p383 = scmp.eq.s32.totalorder %s382, 0
    %s385 = sadd.s32 %s384, 1
    %s386 = scalar_select %p383, %s384, %s385
    %p389 = pneg %p383
    %p390 = scmp.eq.s32.totalorder %s20, 1
    %p391 = por %p389, %p390
    %p392 = scmp.ne.s32.totalorder %s384, %s387
    %p393 = scmp.eq.s32.totalorder %s20, 0
    %p394 = por %p392, %p393
    %p395 = scmp.ne.s32.totalorder %s384, %s387
    %p396 = scmp.eq.s32.totalorder %s25, 1
    %p397 = por %p395, %p396
    %p398 = scmp.ne.s32.totalorder %s387, %s388
    %p399 = scmp.eq.s32.totalorder %s25, 0
    %p400 = por %p398, %p399
    %p401 = scmp.ne.s32.totalorder %s387, %s388
    %p402 = scmp.eq.s32.totalorder %s26, 1
    %p403 = por %p401, %p402
    %p405 = scmp.ne.s32.totalorder %s388, %s404
    %p406 = scmp.eq.s32.totalorder %s26, 0
    %p407 = por %p405, %p406
    %p408 = scmp.le.s32.totalorder 1, %s20
    %p409 = scmp.lt.s32.totalorder %s20, 3
    %p410 = pnand %p408, %p409
    %p411 = pneg %p410
    // Predicated region
    $region9: #{custom_bert_forward.4} parent=5 // pred_check
      _
    $region10: #{custom_bert_forward.4} parent=5 // pred_check_branch
      %413 = sbr.rel (%p410) target = $region12
    $region11: #{custom_bert_forward.4} parent=5 // pred_region
      %s414 = ssub.s32 %s20, 1
      // Predicated region
      $region13: #{custom_bert_forward.4} parent=11 // pred_check
        %p415 = pneg %p41
      $region14: #{custom_bert_forward.4} parent=11 // pred_check_branch
        %417 = sbr.rel (%p415) target = $region16
      $region15: #{custom_bert_forward.4} parent=11 // pred_region
        _
      $region16: #{custom_bert_forward.4} parent=11 // pred_fallthru
        _
      // Predicated region
      $region17: #{custom_bert_forward.4} parent=11 // pred_check
        %p418 = pneg %p62
      $region18: #{custom_bert_forward.4} parent=11 // pred_check_branch
        %420 = sbr.rel (%p418) target = $region20
      $region19: #{custom_bert_forward.4} parent=11 // pred_region
        _
      $region20: #{custom_bert_forward.4} parent=11 // pred_fallthru
        _
    $region12: #{custom_bert_forward.4} parent=5 // pred_fallthru
      _
    %p421 = scmp.lt.s32.totalorder %s20, 2
    // Predicated region
    $region21: #{custom_bert_forward.4} parent=5 // pred_check
      %p422 = pneg %p421
    $region22: #{custom_bert_forward.4} parent=5 // pred_check_branch
      %424 = sbr.rel (%p422) target = $region24
    $region23: #{custom_bert_forward.4} parent=5 // pred_region
      // Predicated region
      $region25: #{custom_bert_forward.4} parent=23 // pred_check
        %p425 = pneg %p82
      $region26: #{custom_bert_forward.4} parent=23 // pred_check_branch
        %427 = sbr.rel (%p425) target = $region28
      $region27: #{custom_bert_forward.4} parent=23 // pred_region
        %p428 = scmp.lt.s32.totalorder %s20, 1
        %s429 = scalar_select %p428, %s20, 1
        %s430 = smul.addr %s429, 4
        %s431 = smul.addr %s430, 8
        %s432 = scalar_lea.vmem %s2, %s431
      $region28: #{custom_bert_forward.4} parent=23 // pred_fallthru
        _
      // Predicated region
      $region29: #{custom_bert_forward.4} parent=23 // pred_check
        %p433 = pneg %p108
      $region30: #{custom_bert_forward.4} parent=23 // pred_check_branch
        %435 = sbr.rel (%p433) target = $region32
      $region31: #{custom_bert_forward.4} parent=23 // pred_region
        %p436 = scmp.lt.s32.totalorder %s20, 1
        %s437 = scalar_select %p436, %s20, 1
        %s438 = scalar_lea.vmem %s3, %s437
      $region32: #{custom_bert_forward.4} parent=23 // pred_fallthru
        _
      // Predicated region
      $region33: #{custom_bert_forward.4} parent=23 // pred_check
        %p439 = pneg %p134
      $region34: #{custom_bert_forward.4} parent=23 // pred_check_branch
        %441 = sbr.rel (%p439) target = $region36
      $region35: #{custom_bert_forward.4} parent=23 // pred_region
        %p442 = scmp.lt.s32.totalorder %s20, 1
        %s443 = scalar_select %p442, %s20, 1
        %s444 = smul.addr %s443, 4
        %s445 = smul.addr %s444, 8
        %s446 = scalar_lea.vmem %s4, %s445
      $region36: #{custom_bert_forward.4} parent=23 // pred_fallthru
        _
      // Predicated region
      $region37: #{custom_bert_forward.4} parent=23 // pred_check
        %p447 = pneg %p160
      $region38: #{custom_bert_forward.4} parent=23 // pred_check_branch
        %449 = sbr.rel (%p447) target = $region40
      $region39: #{custom_bert_forward.4} parent=23 // pred_region
        %p450 = scmp.lt.s32.totalorder %s20, 1
        %s451 = scalar_select %p450, %s20, 1
        %s452 = scalar_lea.vmem %s5, %s451
      $region40: #{custom_bert_forward.4} parent=23 // pred_fallthru
        _
      // Predicated region
      $region41: #{custom_bert_forward.4} parent=23 // pred_check
        %p453 = pneg %p186
      $region42: #{custom_bert_forward.4} parent=23 // pred_check_branch
        %455 = sbr.rel (%p453) target = $region44
      $region43: #{custom_bert_forward.4} parent=23 // pred_region
        %p456 = scmp.lt.s32.totalorder %s20, 1
        %s457 = scalar_select %p456, %s20, 1
        %s458 = scalar_lea.vmem %s6, %s457
      $region44: #{custom_bert_forward.4} parent=23 // pred_fallthru
        _
      // Predicated region
      $region45: #{custom_bert_forward.4} parent=23 // pred_check
        %p459 = pneg %p212
      $region46: #{custom_bert_forward.4} parent=23 // pred_check_branch
        %461 = sbr.rel (%p459) target = $region48
      $region47: #{custom_bert_forward.4} parent=23 // pred_region
        %p462 = scmp.lt.s32.totalorder %s20, 1
        %s463 = scalar_select %p462, %s20, 1
        %s464 = scalar_lea.vmem %s7, %s463
      $region48: #{custom_bert_forward.4} parent=23 // pred_fallthru
        _
      // Predicated region
      $region49: #{custom_bert_forward.4} parent=23 // pred_check
        %p465 = pneg %p238
      $region50: #{custom_bert_forward.4} parent=23 // pred_check_branch
        %467 = sbr.rel (%p465) target = $region52
      $region51: #{custom_bert_forward.4} parent=23 // pred_region
        %p468 = scmp.lt.s32.totalorder %s20, 1
        %s469 = scalar_select %p468, %s20, 1
        %s470 = smul.addr %s469, 4
        %s471 = smul.addr %s470, 8
        %s472 = scalar_lea.vmem %s8, %s471
      $region52: #{custom_bert_forward.4} parent=23 // pred_fallthru
        _
      // Predicated region
      $region53: #{custom_bert_forward.4} parent=23 // pred_check
        %p473 = pneg %p264
      $region54: #{custom_bert_forward.4} parent=23 // pred_check_branch
        %475 = sbr.rel (%p473) target = $region56
      $region55: #{custom_bert_forward.4} parent=23 // pred_region
        %p476 = scmp.lt.s32.totalorder %s20, 1
        %s477 = scalar_select %p476, %s20, 1
        %s478 = scalar_lea.vmem %s9, %s477
      $region56: #{custom_bert_forward.4} parent=23 // pred_fallthru
        _
      // Predicated region
      $region57: #{custom_bert_forward.4} parent=23 // pred_check
        %p479 = pneg %p290
      $region58: #{custom_bert_forward.4} parent=23 // pred_check_branch
        %481 = sbr.rel (%p479) target = $region60
      $region59: #{custom_bert_forward.4} parent=23 // pred_region
        %p482 = scmp.lt.s32.totalorder %s20, 1
        %s483 = scalar_select %p482, %s20, 1
        %s484 = smul.addr %s483, 8
        %s485 = smul.addr %s484, 8
        %s486 = scalar_lea.vmem %s10, %s485
      $region60: #{custom_bert_forward.4} parent=23 // pred_fallthru
        _
      // Predicated region
      $region61: #{custom_bert_forward.4} parent=23 // pred_check
        %p487 = pneg %p316
      $region62: #{custom_bert_forward.4} parent=23 // pred_check_branch
        %489 = sbr.rel (%p487) target = $region64
      $region63: #{custom_bert_forward.4} parent=23 // pred_region
        %p490 = scmp.lt.s32.totalorder %s20, 1
        %s491 = scalar_select %p490, %s20, 1
        %s492 = scalar_lea.vmem %s11, %s491
      $region64: #{custom_bert_forward.4} parent=23 // pred_fallthru
        _
      // Predicated region
      $region65: #{custom_bert_forward.4} parent=23 // pred_check
        %p493 = pneg %p342
      $region66: #{custom_bert_forward.4} parent=23 // pred_check_branch
        %495 = sbr.rel (%p493) target = $region68
      $region67: #{custom_bert_forward.4} parent=23 // pred_region
        %p496 = scmp.lt.s32.totalorder %s20, 1
        %s497 = scalar_select %p496, %s20, 1
        %s498 = scalar_lea.vmem %s12, %s497
      $region68: #{custom_bert_forward.4} parent=23 // pred_fallthru
        _
      // Predicated region
      $region69: #{custom_bert_forward.4} parent=23 // pred_check
        %p499 = pneg %p368
      $region70: #{custom_bert_forward.4} parent=23 // pred_check_branch
        %501 = sbr.rel (%p499) target = $region72
      $region71: #{custom_bert_forward.4} parent=23 // pred_region
        %p502 = scmp.lt.s32.totalorder %s20, 1
        %s503 = scalar_select %p502, %s20, 1
        %s504 = scalar_lea.vmem %s13, %s503
      $region72: #{custom_bert_forward.4} parent=23 // pred_fallthru
        _
    $region24: #{custom_bert_forward.4} parent=5 // pred_fallthru
      _
    %p505 = scmp.le.s32.totalorder 1, %s20
    %p506 = scmp.lt.s32.totalorder %s20, 3
    %p507 = pnand %p505, %p506
    %p508 = pneg %p507
    // Predicated region
    $region73: #{custom_bert_forward.4} parent=5 // pred_check
      _
    $region74: #{custom_bert_forward.4} parent=5 // pred_check_branch
      %510 = sbr.rel (%p507) target = $region76
    $region75: #{custom_bert_forward.4} parent=5 // pred_region
      %s511 = ssub.s32 %s20, 1
      %p512 = pneg %p41
      %p513 = pneg %p38
      %p514 = pneg %p62
      %p515 = pneg %p59
      %p516 = scmp.lt.s32.totalorder %s25, 1
      %s517 = scalar_select %p516, %s25, 1
      %s518 = smul.addr %s517, 4
      %s519 = smul.addr %s518, 8
      %s520 = scalar_lea.vmem %s2, %s519
      %p521 = pneg %p88
      %p522 = pneg %p85
      %p523 = scmp.lt.s32.totalorder %s25, 1
      %s524 = scalar_select %p523, %s25, 1
      %s525 = scalar_lea.vmem %s3, %s524
      %p526 = pneg %p114
      %p527 = pneg %p111
      %p528 = scmp.lt.s32.totalorder %s25, 1
      %s529 = scalar_select %p528, %s25, 1
      %s530 = smul.addr %s529, 4
      %s531 = smul.addr %s530, 8
      %s532 = scalar_lea.vmem %s4, %s531
      %p533 = pneg %p140
      %p534 = pneg %p137
      %p535 = scmp.lt.s32.totalorder %s25, 1
      %s536 = scalar_select %p535, %s25, 1
      %s537 = scalar_lea.vmem %s5, %s536
      %p538 = pneg %p166
      %p539 = pneg %p163
      %p540 = scmp.lt.s32.totalorder %s25, 1
      %s541 = scalar_select %p540, %s25, 1
      %s542 = scalar_lea.vmem %s6, %s541
      %p543 = pneg %p192
      %p544 = pneg %p189
      %p545 = scmp.lt.s32.totalorder %s25, 1
      %s546 = scalar_select %p545, %s25, 1
      %s547 = scalar_lea.vmem %s7, %s546
      %p548 = pneg %p218
      %p549 = pneg %p215
      %p550 = scmp.lt.s32.totalorder %s25, 1
      %s551 = scalar_select %p550, %s25, 1
      %s552 = smul.addr %s551, 4
      %s553 = smul.addr %s552, 8
      %s554 = scalar_lea.vmem %s8, %s553
      %p555 = pneg %p244
      %p556 = pneg %p241
      %p557 = scmp.lt.s32.totalorder %s25, 1
      %s558 = scalar_select %p557, %s25, 1
      %s559 = scalar_lea.vmem %s9, %s558
      %p560 = pneg %p270
      %p561 = pneg %p267
      %p562 = scmp.lt.s32.totalorder %s25, 1
      %s563 = scalar_select %p562, %s25, 1
      %s564 = smul.addr %s563, 8
      %s565 = smul.addr %s564, 8
      %s566 = scalar_lea.vmem %s10, %s565
      %p567 = pneg %p296
      %p568 = pneg %p293
      %p569 = scmp.lt.s32.totalorder %s25, 1
      %s570 = scalar_select %p569, %s25, 1
      %s571 = scalar_lea.vmem %s11, %s570
      %p572 = pneg %p322
      %p573 = pneg %p319
      %p574 = scmp.lt.s32.totalorder %s25, 1
      %s575 = scalar_select %p574, %s25, 1
      %s576 = scalar_lea.vmem %s12, %s575
      %p577 = pneg %p348
      %p578 = pneg %p345
      %p579 = scmp.lt.s32.totalorder %s25, 1
      %s580 = scalar_select %p579, %s25, 1
      %s581 = scalar_lea.vmem %s13, %s580
      %p582 = pneg %p374
      %p583 = pneg %p371
      %p584 = pneg %p400
      %p585 = pneg %p397
      %p586 = scmp.lt.s32.totalorder %s25, 1
      %s587 = scalar_select %p586, %s25, 1
      %s588 = smul.addr %s587, 2
      %s589 = smul.addr %s588, 8
      %s590 = scalar_lea.vmem %s14, %s589
      %p591 = scmp.lt.s32.totalorder %s25, 1
      %s592 = scalar_select %p591, %s25, 1
      %s593 = smul.addr %s592, 4
      %s594 = smul.addr %s593, 8
      %s595 = scalar_lea.vmem %s2, %s594
      %p596 = scmp.lt.s32.totalorder %s25, 1
      %s597 = scalar_select %p596, %s25, 1
      %s598 = scalar_lea.vmem %s3, %s597
      %p599 = scmp.lt.s32.totalorder %s25, 1
      %s600 = scalar_select %p599, %s25, 1
      %s601 = smul.addr %s600, 4
      %s602 = smul.addr %s601, 8
      %s603 = scalar_lea.vmem %s4, %s602
      %p604 = scmp.lt.s32.totalorder %s25, 1
      %s605 = scalar_select %p604, %s25, 1
      %s606 = scalar_lea.vmem %s5, %s605
      %p607 = scmp.lt.s32.totalorder %s25, 1
      %s608 = scalar_select %p607, %s25, 1
      %s609 = scalar_lea.vmem %s6, %s608
      %p610 = scmp.lt.s32.totalorder %s25, 1
      %s611 = scalar_select %p610, %s25, 1
      %s612 = scalar_lea.vmem %s7, %s611
      %p613 = scmp.lt.s32.totalorder %s25, 1
      %s614 = scalar_select %p613, %s25, 1
      %s615 = smul.addr %s614, 4
      %s616 = smul.addr %s615, 8
      %s617 = scalar_lea.vmem %s8, %s616
      %p618 = scmp.lt.s32.totalorder %s25, 1
      %s619 = scalar_select %p618, %s25, 1
      %s620 = scalar_lea.vmem %s9, %s619
      %p621 = scmp.lt.s32.totalorder %s25, 1
      %s622 = scalar_select %p621, %s25, 1
      %s623 = smul.addr %s622, 8
      %s624 = smul.addr %s623, 8
      %s625 = scalar_lea.vmem %s10, %s624
      %p626 = scmp.lt.s32.totalorder %s25, 1
      %s627 = scalar_select %p626, %s25, 1
      %s628 = scalar_lea.vmem %s11, %s627
      %p629 = scmp.lt.s32.totalorder %s25, 1
      %s630 = scalar_select %p629, %s25, 1
      %s631 = scalar_lea.vmem %s12, %s630
      %p632 = scmp.lt.s32.totalorder %s25, 1
      %s633 = scalar_select %p632, %s25, 1
      %s634 = scalar_lea.vmem %s13, %s633
      %p635 = scmp.lt.s32.totalorder %s25, 1
      %s636 = scalar_select %p635, %s25, 1
      %s637 = smul.addr %s636, 2
      %s638 = smul.addr %s637, 8
      %s639 = scalar_lea.vmem %s14, %s638
      %p640 = scmp.eq.s32.totalorder %s25, 0
      // Predicated region
      $region77: #{custom_bert_forward.4} parent=75 // pred_check
        %p641 = pneg %p640
      $region78: #{custom_bert_forward.4} parent=75 // pred_check_branch
        %643 = sbr.rel (%p641) target = $region80
      $region79: #{custom_bert_forward.4} parent=75 // pred_region
        %v644 = vld [vmem:[%s0] sm:$0xff]
        %v645 = vld [vmem:[%s0 + $0x8] sm:$0xff]
        %vm646 = vcmask 261120
        %647 = vst.msk [vmem:[#allocation2] sm:$0xff] %vm646, %v644
        %648 = vst.msk [vmem:[#allocation2 + $0x8] sm:$0xff] %vm646, %v645
      $region80: #{custom_bert_forward.4} parent=75 // pred_fallthru
        _
      %v649 = vld [vmem:[#allocation2] sm:$0xff]
      %v650 = vld [vmem:[#allocation2 + $0x8] sm:$0xff]
      %v651 = vld [vmem:[%s595] sm:$0xff]
      %v652 = vld [vmem:[%s595 + $0x8] sm:$0xff]
      %v653 = vld [vmem:[%s595 + $0x10] sm:$0xff]
      %v654 = vld [vmem:[%s595 + $0x18] sm:$0xff]
      %v655 = vld [vmem:[%s598] sm:$0x1]
      %v657 = vlaneseq
      %v658 = vshrl.u32 %v657, 7
      %v659 = vsub.s32 0, %v658
      %v660 = vrot.slane %v655, %v659
      %vm662 = vcmask 261120
      %v664 = vsel %vm662, %v649, 0
      %v667 = vsel %vm662, %v650, 0
      %669 = vmatprep.subr.mxu0 0.0
      %670 = vmatpush1.msra.mxu0 %v651
      %671 = vmatprep.subr.mxu0 0.0
      %672 = vmatpush1.msra.mxu0 %v652
      %673 = vmatprep.subr.mxu0 0.0
      %674 = vmatpush1.msra.mxu0 %v653
      %675 = vmatprep.subr.mxu0 0.0
      %676 = vmatpush1.msra.mxu0 %v654
      %677 = vmatprep.subr.mxu0 0.0
      %678 = vmatpush1.msra.mxu0 0.0
      %679 = vmatprep.subr.mxu0 0.0
      %680 = vmatpush1.msra.mxu0 0.0
      %681 = vmatprep.subr.mxu0 0.0
      %682 = vmatpush1.msra.mxu0 0.0
      %683 = vmatprep.subr.mxu0 0.0
      %684 = vmatpush1.msra.mxu0 0.0
      %685 = vmatprep.subr.mxu0 0.0
      %686 = vmatpush1.msra.mxu0 0.0
      %687 = vmatprep.subr.mxu0 0.0
      %688 = vmatpush1.msra.mxu0 0.0
      %689 = vmatprep.subr.mxu0 0.0
      %690 = vmatpush1.msra.mxu0 0.0
      %691 = vmatprep.subr.mxu0 0.0
      %692 = vmatpush1.msra.mxu0 0.0
      %693 = vmatprep.subr.mxu0 0.0
      %694 = vmatpush1.msra.mxu0 0.0
      %695 = vmatprep.subr.mxu0 0.0
      %696 = vmatpush1.msra.mxu0 0.0
      %697 = vmatprep.subr.mxu0 0.0
      %698 = vmatpush1.msra.mxu0 0.0
      %699 = vmatprep.subr.mxu0 0.0
      %700 = vmatpush1.msra.mxu0 0.0
      %701 = vmatprep.subr.mxu0 0.0
      %702 = vmatpush1.msra.mxu0 0.0
      %703 = vmatprep.subr.mxu0 0.0
      %704 = vmatpush1.msra.mxu0 0.0
      %705 = vmatprep.subr.mxu0 0.0
      %706 = vmatpush1.msra.mxu0 0.0
      %707 = vmatprep.subr.mxu0 0.0
      %708 = vmatpush1.msra.mxu0 0.0
      %709 = vmatprep.subr.mxu0 0.0
      %710 = vmatpush1.msra.mxu0 0.0
      %711 = vmatprep.subr.mxu0 0.0
      %712 = vmatpush1.msra.mxu0 0.0
      %713 = vmatprep.subr.mxu0 0.0
      %714 = vmatpush1.msra.mxu0 0.0
      %715 = vmatprep.subr.mxu0 0.0
      %716 = vmatpush1.msra.mxu0 0.0
      %717 = vmatprep.subr.mxu0 0.0
      %718 = vmatpush1.msra.mxu0 0.0
      %719 = vmatprep.subr.mxu0 0.0
      %720 = vmatpush1.msra.mxu0 0.0
      %721 = vmatprep.subr.mxu0 0.0
      %722 = vmatpush1.msra.mxu0 0.0
      %723 = vmatprep.subr.mxu0 0.0
      %724 = vmatpush1.msra.mxu0 0.0
      %725 = vmatprep.subr.mxu0 0.0
      %726 = vmatpush1.msra.mxu0 0.0
      %727 = vmatprep.subr.mxu0 0.0
      %728 = vmatpush1.msra.mxu0 0.0
      %729 = vmatprep.subr.mxu0 0.0
      %730 = vmatpush1.msra.mxu0 0.0
      %731 = vmatprep.subr.mxu0 0.0
      %732 = vmatpush1.msra.mxu0 0.0
      %733 = vmatprep.mubr.f32.mxu0 0.0
      %734 = vmatmul.mubr.f32.gmra.mrb[0].mxu0 %v664
      %v735 = vpop.f32.mrb[0].mxu0
      %v736 = vadd.f32 %v660, %v735
      %v737 = vpop.f32.mrb[0].mxu0
      %738 = vmatprep.mubr.f32.mxu0 0.0
      %739 = vmatmul.mubr.f32.gmra.mrb[0].mxu0 %v667
      %v740 = vpop.f32.mrb[0].mxu0
      %v741 = vadd.f32 %v660, %v740
      %v742 = vpop.f32.mrb[0].mxu0
      %743 = vdwg.mxu0
      %v744 = vld [vmem:[%s603] sm:$0xff]
      %v745 = vld [vmem:[%s603 + $0x8] sm:$0xff]
      %v746 = vld [vmem:[%s603 + $0x10] sm:$0xff]
      %v747 = vld [vmem:[%s603 + $0x18] sm:$0xff]
      %750 = vrot.lane.b32.xlu0 %v736, 96
      %v751 = vpop.permute.xlu0 %750
      %752 = vrot.lane.b32.xlu0 %v741, 96
      %v753 = vpop.permute.xlu0 %752
      %vm754 = vcmask 130048
      %v755 = vsel %vm754, %v736, 0
      %v757 = vsel %vm754, %v741, 0
      %v759 = vsel %vm754, %v751, 0
      %v761 = vsel %vm754, %v753, 0
      %763 = vmatprep.subr.mxu0 0.0
      %764 = vmatpush1.xpose.msra.mxu0 %v759
      %765 = vmatprep.subr.mxu0 0.0
      %766 = vmatpush1.xpose.msra.mxu0 %v761
      %767 = vmatprep.subr.mxu0 0.0
      %768 = vmatpush1.xpose.msra.mxu0 0.0
      %769 = vmatprep.subr.mxu0 0.0
      %770 = vmatpush1.xpose.msra.mxu0 0.0
      %771 = vmatprep.subr.mxu0 0.0
      %772 = vmatpush1.xpose.msra.mxu0 0.0
      %773 = vmatprep.subr.mxu0 0.0
      %774 = vmatpush1.xpose.msra.mxu0 0.0
      %775 = vmatprep.subr.mxu0 0.0
      %776 = vmatpush1.xpose.msra.mxu0 0.0
      %777 = vmatprep.subr.mxu0 0.0
      %778 = vmatpush1.xpose.msra.mxu0 0.0
      %779 = vmatprep.subr.mxu0 0.0
      %780 = vmatpush1.xpose.msra.mxu0 0.0
      %781 = vmatprep.subr.mxu0 0.0
      %782 = vmatpush1.xpose.msra.mxu0 0.0
      %783 = vmatprep.subr.mxu0 0.0
      %784 = vmatpush1.xpose.msra.mxu0 0.0
      %785 = vmatprep.subr.mxu0 0.0
      %786 = vmatpush1.xpose.msra.mxu0 0.0
      %787 = vmatprep.subr.mxu0 0.0
      %788 = vmatpush1.xpose.msra.mxu0 0.0
      %789 = vmatprep.subr.mxu0 0.0
      %790 = vmatpush1.xpose.msra.mxu0 0.0
      %791 = vmatprep.subr.mxu0 0.0
      %792 = vmatpush1.xpose.msra.mxu0 0.0
      %793 = vmatprep.subr.mxu0 0.0
      %794 = vmatpush1.xpose.msra.mxu0 0.0
      %795 = vmatprep.subr.mxu0 0.0
      %796 = vmatpush1.xpose.msra.mxu0 0.0
      %797 = vmatprep.subr.mxu0 0.0
      %798 = vmatpush1.xpose.msra.mxu0 0.0
      %799 = vmatprep.subr.mxu0 0.0
      %800 = vmatpush1.xpose.msra.mxu0 0.0
      %801 = vmatprep.subr.mxu0 0.0
      %802 = vmatpush1.xpose.msra.mxu0 0.0
      %803 = vmatprep.subr.mxu0 0.0
      %804 = vmatpush1.xpose.msra.mxu0 0.0
      %805 = vmatprep.subr.mxu0 0.0
      %806 = vmatpush1.xpose.msra.mxu0 0.0
      %807 = vmatprep.subr.mxu0 0.0
      %808 = vmatpush1.xpose.msra.mxu0 0.0
      %809 = vmatprep.subr.mxu0 0.0
      %810 = vmatpush1.xpose.msra.mxu0 0.0
      %811 = vmatprep.subr.mxu0 0.0
      %812 = vmatpush1.xpose.msra.mxu0 0.0
      %813 = vmatprep.subr.mxu0 0.0
      %814 = vmatpush1.xpose.msra.mxu0 0.0
      %815 = vmatprep.subr.mxu0 0.0
      %816 = vmatpush1.xpose.msra.mxu0 0.0
      %817 = vmatprep.subr.mxu0 0.0
      %818 = vmatpush1.xpose.msra.mxu0 0.0
      %819 = vmatprep.subr.mxu0 0.0
      %820 = vmatpush1.xpose.msra.mxu0 0.0
      %821 = vmatprep.subr.mxu0 0.0
      %822 = vmatpush1.xpose.msra.mxu0 0.0
      %823 = vmatprep.subr.mxu0 0.0
      %824 = vmatpush1.xpose.msra.mxu0 0.0
      %825 = vmatprep.subr.mxu0 0.0
      %826 = vmatpush1.xpose.msra.mxu0 0.0
      %827 = vmatprep.mubr.f32.mxu0 0.0
      %828 = vmatmul.mubr.f32.gmra.mrb[0].mxu0 %v755
      %v829 = vpop.f32.mrb[0].mxu0
      %v830 = vadd.f32 0.0, %v829
      %v831 = vpop.f32.mrb[0].mxu0
      %832 = vmatprep.mubr.f32.mxu0 0.0
      %833 = vmatmul.mubr.f32.gmra.mrb[0].mxu0 %v757
      %v834 = vpop.f32.mrb[0].mxu0
      %v835 = vadd.f32 0.0, %v834
      %v836 = vpop.f32.mrb[0].mxu0
      %837 = vdwg.mxu0
      %v838 = vmul.f32 %v830, 0.25
      %v839 = vmul.f32 %v835, 0.25
      %v840 = vld [vmem:[%s1] sm:$0xff]
      %v841 = vld [vmem:[%s1 + $0x8] sm:$0xff]
      %v842 = vadd.f32 %v838, %v840
      %v843 = vadd.f32 %v839, %v841
      %v844 = vsel %vm754, %v842, -inf
      %845 = vmax.xlane.f32.xlu0 %v844
      %v846 = vpop.xlane.xlu0 %845
      %v847 = vsel %vm754, %v843, -inf
      %848 = vmax.xlane.f32.xlu0 %v847
      %v849 = vpop.xlane.xlu0 %848
      %v850 = vsub.f32 %v842, %v846
      %v851 = vsub.f32 %v843, %v849
      %v852 = vmul.f32 %v850, 1.442695
      %v853 = vpow.pop %v852
      %v854 = vmul.f32 %v851, 1.442695
      %v855 = vpow.pop %v854
      %v856 = vsel %vm754, %v853, 0.0
      %857 = vadd.xlane.f32.xlu0 %v856
      %v858 = vpop.xlane.xlu0 %857
      %v859 = vsel %vm754, %v855, 0.0
      %860 = vadd.xlane.f32.xlu0 %v859
      %v861 = vpop.xlane.xlu0 %860
      %v862 = vrcp.pop %v858
      %v863 = vrcp.pop %v861
      %v864 = vmul.f32 %v853, %v862
      %v865 = vmul.f32 %v855, %v863
      %866 = vrot.lane.b32.xlu0 %v736, 64
      %v867 = vpop.permute.xlu0 %866
      %868 = vrot.lane.b32.xlu0 %v741, 64
      %v869 = vpop.permute.xlu0 %868
      %v873 = vsel %vm754, %v864, 0
      %v876 = vsel %vm754, %v865, 0
      %878 = vmatprep.subr.mxu0 0.0
      %879 = vmatpush1.msra.mxu0 %v867
      %880 = vmatprep.subr.mxu0 0.0
      %881 = vmatpush1.msra.mxu0 %v869
      %882 = vmatprep.subr.mxu0 0.0
      %883 = vmatpush1.msra.mxu0 0.0
      %884 = vmatprep.subr.mxu0 0.0
      %885 = vmatpush1.msra.mxu0 0.0
      %886 = vmatprep.subr.mxu0 0.0
      %887 = vmatpush1.msra.mxu0 0.0
      %888 = vmatprep.subr.mxu0 0.0
      %889 = vmatpush1.msra.mxu0 0.0
      %890 = vmatprep.subr.mxu0 0.0
      %891 = vmatpush1.msra.mxu0 0.0
      %892 = vmatprep.subr.mxu0 0.0
      %893 = vmatpush1.msra.mxu0 0.0
      %894 = vmatprep.subr.mxu0 0.0
      %895 = vmatpush1.msra.mxu0 0.0
      %896 = vmatprep.subr.mxu0 0.0
      %897 = vmatpush1.msra.mxu0 0.0
      %898 = vmatprep.subr.mxu0 0.0
      %899 = vmatpush1.msra.mxu0 0.0
      %900 = vmatprep.subr.mxu0 0.0
      %901 = vmatpush1.msra.mxu0 0.0
      %902 = vmatprep.subr.mxu0 0.0
      %903 = vmatpush1.msra.mxu0 0.0
      %904 = vmatprep.subr.mxu0 0.0
      %905 = vmatpush1.msra.mxu0 0.0
      %906 = vmatprep.subr.mxu0 0.0
      %907 = vmatpush1.msra.mxu0 0.0
      %908 = vmatprep.subr.mxu0 0.0
      %909 = vmatpush1.msra.mxu0 0.0
      %910 = vmatprep.subr.mxu0 0.0
      %911 = vmatpush1.msra.mxu0 0.0
      %912 = vmatprep.subr.mxu0 0.0
      %913 = vmatpush1.msra.mxu0 0.0
      %914 = vmatprep.subr.mxu0 0.0
      %915 = vmatpush1.msra.mxu0 0.0
      %916 = vmatprep.subr.mxu0 0.0
      %917 = vmatpush1.msra.mxu0 0.0
      %918 = vmatprep.subr.mxu0 0.0
      %919 = vmatpush1.msra.mxu0 0.0
      %920 = vmatprep.subr.mxu0 0.0
      %921 = vmatpush1.msra.mxu0 0.0
      %922 = vmatprep.subr.mxu0 0.0
      %923 = vmatpush1.msra.mxu0 0.0
      %924 = vmatprep.subr.mxu0 0.0
      %925 = vmatpush1.msra.mxu0 0.0
      %926 = vmatprep.subr.mxu0 0.0
      %927 = vmatpush1.msra.mxu0 0.0
      %928 = vmatprep.subr.mxu0 0.0
      %929 = vmatpush1.msra.mxu0 0.0
      %930 = vmatprep.subr.mxu0 0.0
      %931 = vmatpush1.msra.mxu0 0.0
      %932 = vmatprep.subr.mxu0 0.0
      %933 = vmatpush1.msra.mxu0 0.0
      %934 = vmatprep.subr.mxu0 0.0
      %935 = vmatpush1.msra.mxu0 0.0
      %936 = vmatprep.subr.mxu0 0.0
      %937 = vmatpush1.msra.mxu0 0.0
      %938 = vmatprep.subr.mxu0 0.0
      %939 = vmatpush1.msra.mxu0 0.0
      %940 = vmatprep.subr.mxu0 0.0
      %941 = vmatpush1.msra.mxu0 0.0
      %942 = vmatprep.mubr.f32.mxu0 0.0
      %943 = vmatmul.mubr.f32.gmra.mrb[0].mxu0 %v873
      %v944 = vpop.f32.mrb[0].mxu0
      %v945 = vadd.f32 0.0, %v944
      %v946 = vpop.f32.mrb[0].mxu0
      %947 = vmatprep.mubr.f32.mxu0 0.0
      %948 = vmatmul.mubr.f32.gmra.mrb[0].mxu0 %v876
      %v949 = vpop.f32.mrb[0].mxu0
      %v950 = vadd.f32 0.0, %v949
      %v951 = vpop.f32.mrb[0].mxu0
      %952 = vdwg.mxu0
      %953 = vrot.lane.b32.xlu0 %v736, 112
      %v954 = vpop.permute.xlu0 %953
      %955 = vrot.lane.b32.xlu0 %v741, 112
      %v956 = vpop.permute.xlu0 %955
      %957 = vrot.lane.b32.xlu0 %v736, 80
      %v958 = vpop.permute.xlu0 %957
      %959 = vrot.lane.b32.xlu0 %v741, 80
      %v960 = vpop.permute.xlu0 %959
      %v961 = vsel %vm754, %v954, 0
      %v963 = vsel %vm754, %v956, 0
      %v965 = vsel %vm754, %v958, 0
      %v967 = vsel %vm754, %v960, 0
      %969 = vmatprep.subr.mxu0 0.0
      %970 = vmatpush1.xpose.msra.mxu0 %v965
      %971 = vmatprep.subr.mxu0 0.0
      %972 = vmatpush1.xpose.msra.mxu0 %v967
      %973 = vmatprep.subr.mxu0 0.0
      %974 = vmatpush1.xpose.msra.mxu0 0.0
      %975 = vmatprep.subr.mxu0 0.0
      %976 = vmatpush1.xpose.msra.mxu0 0.0
      %977 = vmatprep.subr.mxu0 0.0
      %978 = vmatpush1.xpose.msra.mxu0 0.0
      %979 = vmatprep.subr.mxu0 0.0
      %980 = vmatpush1.xpose.msra.mxu0 0.0
      %981 = vmatprep.subr.mxu0 0.0
      %982 = vmatpush1.xpose.msra.mxu0 0.0
      %983 = vmatprep.subr.mxu0 0.0
      %984 = vmatpush1.xpose.msra.mxu0 0.0
      %985 = vmatprep.subr.mxu0 0.0
      %986 = vmatpush1.xpose.msra.mxu0 0.0
      %987 = vmatprep.subr.mxu0 0.0
      %988 = vmatpush1.xpose.msra.mxu0 0.0
      %989 = vmatprep.subr.mxu0 0.0
      %990 = vmatpush1.xpose.msra.mxu0 0.0
      %991 = vmatprep.subr.mxu0 0.0
      %992 = vmatpush1.xpose.msra.mxu0 0.0
      %993 = vmatprep.subr.mxu0 0.0
      %994 = vmatpush1.xpose.msra.mxu0 0.0
      %995 = vmatprep.subr.mxu0 0.0
      %996 = vmatpush1.xpose.msra.mxu0 0.0
      %997 = vmatprep.subr.mxu0 0.0
      %998 = vmatpush1.xpose.msra.mxu0 0.0
      %999 = vmatprep.subr.mxu0 0.0
      %1000 = vmatpush1.xpose.msra.mxu0 0.0
      %1001 = vmatprep.subr.mxu0 0.0
      %1002 = vmatpush1.xpose.msra.mxu0 0.0
      %1003 = vmatprep.subr.mxu0 0.0
      %1004 = vmatpush1.xpose.msra.mxu0 0.0
      %1005 = vmatprep.subr.mxu0 0.0
      %1006 = vmatpush1.xpose.msra.mxu0 0.0
      %1007 = vmatprep.subr.mxu0 0.0
      %1008 = vmatpush1.xpose.msra.mxu0 0.0
      %1009 = vmatprep.subr.mxu0 0.0
      %1010 = vmatpush1.xpose.msra.mxu0 0.0
      %1011 = vmatprep.subr.mxu0 0.0
      %1012 = vmatpush1.xpose.msra.mxu0 0.0
      %1013 = vmatprep.subr.mxu0 0.0
      %1014 = vmatpush1.xpose.msra.mxu0 0.0
      %1015 = vmatprep.subr.mxu0 0.0
      %1016 = vmatpush1.xpose.msra.mxu0 0.0
      %1017 = vmatprep.subr.mxu0 0.0
      %1018 = vmatpush1.xpose.msra.mxu0 0.0
      %1019 = vmatprep.subr.mxu0 0.0
      %1020 = vmatpush1.xpose.msra.mxu0 0.0
      %1021 = vmatprep.subr.mxu0 0.0
      %1022 = vmatpush1.xpose.msra.mxu0 0.0
      %1023 = vmatprep.subr.mxu0 0.0
      %1024 = vmatpush1.xpose.msra.mxu0 0.0
      %1025 = vmatprep.subr.mxu0 0.0
      %1026 = vmatpush1.xpose.msra.mxu0 0.0
      %1027 = vmatprep.subr.mxu0 0.0
      %1028 = vmatpush1.xpose.msra.mxu0 0.0
      %1029 = vmatprep.subr.mxu0 0.0
      %1030 = vmatpush1.xpose.msra.mxu0 0.0
      %1031 = vmatprep.subr.mxu0 0.0
      %1032 = vmatpush1.xpose.msra.mxu0 0.0
      %1033 = vmatprep.mubr.f32.mxu0 0.0
      %1034 = vmatmul.mubr.f32.gmra.mrb[0].mxu0 %v961
      %v1035 = vpop.f32.mrb[0].mxu0
      %v1036 = vadd.f32 0.0, %v1035
      %v1037 = vpop.f32.mrb[0].mxu0
      %1038 = vmatprep.mubr.f32.mxu0 0.0
      %1039 = vmatmul.mubr.f32.gmra.mrb[0].mxu0 %v963
      %v1040 = vpop.f32.mrb[0].mxu0
      %v1041 = vadd.f32 0.0, %v1040
      %v1042 = vpop.f32.mrb[0].mxu0
      %1043 = vdwg.mxu0
      %v1044 = vmul.f32 %v1036, 0.25
      %v1045 = vmul.f32 %v1041, 0.25
      %v1046 = vadd.f32 %v1044, %v840
      %v1047 = vadd.f32 %v1045, %v841
      %v1048 = vsel %vm754, %v1046, -inf
      %1049 = vmax.xlane.f32.xlu0 %v1048
      %v1050 = vpop.xlane.xlu0 %1049
      %v1051 = vsel %vm754, %v1047, -inf
      %1052 = vmax.xlane.f32.xlu0 %v1051
      %v1053 = vpop.xlane.xlu0 %1052
      %v1054 = vsub.f32 %v1046, %v1050
      %v1055 = vsub.f32 %v1047, %v1053
      %v1056 = vmul.f32 %v1054, 1.442695
      %v1057 = vpow.pop %v1056
      %v1058 = vmul.f32 %v1055, 1.442695
      %v1059 = vpow.pop %v1058
      %v1060 = vsel %vm754, %v1057, 0.0
      %1061 = vadd.xlane.f32.xlu0 %v1060
      %v1062 = vpop.xlane.xlu0 %1061
      %v1063 = vsel %vm754, %v1059, 0.0
      %1064 = vadd.xlane.f32.xlu0 %v1063
      %v1065 = vpop.xlane.xlu0 %1064
      %v1066 = vrcp.pop %v1062
      %v1067 = vrcp.pop %v1065
      %v1068 = vmul.f32 %v1057, %v1066
      %v1069 = vmul.f32 %v1059, %v1067
      %1070 = vrot.lane.b32.xlu0 %v736, 48
      %v1071 = vpop.permute.xlu0 %1070
      %1072 = vrot.lane.b32.xlu0 %v741, 48
      %v1073 = vpop.permute.xlu0 %1072
      %v1077 = vsel %vm754, %v1068, 0
      %v1080 = vsel %vm754, %v1069, 0
      %1082 = vmatprep.subr.mxu0 0.0
      %1083 = vmatpush1.msra.mxu0 %v1071
      %1084 = vmatprep.subr.mxu0 0.0
      %1085 = vmatpush1.msra.mxu0 %v1073
      %1086 = vmatprep.subr.mxu0 0.0
      %1087 = vmatpush1.msra.mxu0 0.0
      %1088 = vmatprep.subr.mxu0 0.0
      %1089 = vmatpush1.msra.mxu0 0.0
      %1090 = vmatprep.subr.mxu0 0.0
      %1091 = vmatpush1.msra.mxu0 0.0
      %1092 = vmatprep.subr.mxu0 0.0
      %1093 = vmatpush1.msra.mxu0 0.0
      %1094 = vmatprep.subr.mxu0 0.0
      %1095 = vmatpush1.msra.mxu0 0.0
      %1096 = vmatprep.subr.mxu0 0.0
      %1097 = vmatpush1.msra.mxu0 0.0
      %1098 = vmatprep.subr.mxu0 0.0
      %1099 = vmatpush1.msra.mxu0 0.0
      %1100 = vmatprep.subr.mxu0 0.0
      %1101 = vmatpush1.msra.mxu0 0.0
      %1102 = vmatprep.subr.mxu0 0.0
      %1103 = vmatpush1.msra.mxu0 0.0
      %1104 = vmatprep.subr.mxu0 0.0
      %1105 = vmatpush1.msra.mxu0 0.0
      %1106 = vmatprep.subr.mxu0 0.0
      %1107 = vmatpush1.msra.mxu0 0.0
      %1108 = vmatprep.subr.mxu0 0.0
      %1109 = vmatpush1.msra.mxu0 0.0
      %1110 = vmatprep.subr.mxu0 0.0
      %1111 = vmatpush1.msra.mxu0 0.0
      %1112 = vmatprep.subr.mxu0 0.0
      %1113 = vmatpush1.msra.mxu0 0.0
      %1114 = vmatprep.subr.mxu0 0.0
      %1115 = vmatpush1.msra.mxu0 0.0
      %1116 = vmatprep.subr.mxu0 0.0
      %1117 = vmatpush1.msra.mxu0 0.0
      %1118 = vmatprep.subr.mxu0 0.0
      %1119 = vmatpush1.msra.mxu0 0.0
      %1120 = vmatprep.subr.mxu0 0.0
      %1121 = vmatpush1.msra.mxu0 0.0
      %1122 = vmatprep.subr.mxu0 0.0
      %1123 = vmatpush1.msra.mxu0 0.0
      %1124 = vmatprep.subr.mxu0 0.0
      %1125 = vmatpush1.msra.mxu0 0.0
      %1126 = vmatprep.subr.mxu0 0.0
      %1127 = vmatpush1.msra.mxu0 0.0
      %1128 = vmatprep.subr.mxu0 0.0
      %1129 = vmatpush1.msra.mxu0 0.0
      %1130 = vmatprep.subr.mxu0 0.0
      %1131 = vmatpush1.msra.mxu0 0.0
      %1132 = vmatprep.subr.mxu0 0.0
      %1133 = vmatpush1.msra.mxu0 0.0
      %1134 = vmatprep.subr.mxu0 0.0
      %1135 = vmatpush1.msra.mxu0 0.0
      %1136 = vmatprep.subr.mxu0 0.0
      %1137 = vmatpush1.msra.mxu0 0.0
      %1138 = vmatprep.subr.mxu0 0.0
      %1139 = vmatpush1.msra.mxu0 0.0
      %1140 = vmatprep.subr.mxu0 0.0
      %1141 = vmatpush1.msra.mxu0 0.0
      %1142 = vmatprep.subr.mxu0 0.0
      %1143 = vmatpush1.msra.mxu0 0.0
      %1144 = vmatprep.subr.mxu0 0.0
      %1145 = vmatpush1.msra.mxu0 0.0
      %1146 = vmatprep.mubr.f32.mxu0 0.0
      %1147 = vmatmul.mubr.f32.gmra.mrb[0].mxu0 %v1077
      %v1148 = vpop.f32.mrb[0].mxu0
      %v1149 = vadd.f32 0.0, %v1148
      %v1150 = vpop.f32.mrb[0].mxu0
      %1151 = vmatprep.mubr.f32.mxu0 0.0
      %1152 = vmatmul.mubr.f32.gmra.mrb[0].mxu0 %v1080
      %v1153 = vpop.f32.mrb[0].mxu0
      %v1154 = vadd.f32 0.0, %v1153
      %v1155 = vpop.f32.mrb[0].mxu0
      %1156 = vdwg.mxu0
      %v1158 = vsel %vm754, %v1149, 0
      %v1161 = vsel %vm754, %v1154, 0
      %1163 = vmatprep.subr.mxu0 0.0
      %1164 = vmatpush1.msra.mxu0 %v746
      %1165 = vmatprep.subr.mxu0 0.0
      %1166 = vmatpush1.msra.mxu0 %v747
      %1167 = vmatprep.subr.mxu0 0.0
      %1168 = vmatpush1.msra.mxu0 0.0
      %1169 = vmatprep.subr.mxu0 0.0
      %1170 = vmatpush1.msra.mxu0 0.0
      %1171 = vmatprep.subr.mxu0 0.0
      %1172 = vmatpush1.msra.mxu0 0.0
      %1173 = vmatprep.subr.mxu0 0.0
      %1174 = vmatpush1.msra.mxu0 0.0
      %1175 = vmatprep.subr.mxu0 0.0
      %1176 = vmatpush1.msra.mxu0 0.0
      %1177 = vmatprep.subr.mxu0 0.0
      %1178 = vmatpush1.msra.mxu0 0.0
      %1179 = vmatprep.subr.mxu0 0.0
      %1180 = vmatpush1.msra.mxu0 0.0
      %1181 = vmatprep.subr.mxu0 0.0
      %1182 = vmatpush1.msra.mxu0 0.0
      %1183 = vmatprep.subr.mxu0 0.0
      %1184 = vmatpush1.msra.mxu0 0.0
      %1185 = vmatprep.subr.mxu0 0.0
      %1186 = vmatpush1.msra.mxu0 0.0
      %1187 = vmatprep.subr.mxu0 0.0
      %1188 = vmatpush1.msra.mxu0 0.0
      %1189 = vmatprep.subr.mxu0 0.0
      %1190 = vmatpush1.msra.mxu0 0.0
      %1191 = vmatprep.subr.mxu0 0.0
      %1192 = vmatpush1.msra.mxu0 0.0
      %1193 = vmatprep.subr.mxu0 0.0
      %1194 = vmatpush1.msra.mxu0 0.0
      %1195 = vmatprep.subr.mxu0 0.0
      %1196 = vmatpush1.msra.mxu0 0.0
      %1197 = vmatprep.subr.mxu0 0.0
      %1198 = vmatpush1.msra.mxu0 0.0
      %1199 = vmatprep.subr.mxu0 0.0
      %1200 = vmatpush1.msra.mxu0 0.0
      %1201 = vmatprep.subr.mxu0 0.0
      %1202 = vmatpush1.msra.mxu0 0.0
      %1203 = vmatprep.subr.mxu0 0.0
      %1204 = vmatpush1.msra.mxu0 0.0
      %1205 = vmatprep.subr.mxu0 0.0
      %1206 = vmatpush1.msra.mxu0 0.0
      %1207 = vmatprep.subr.mxu0 0.0
      %1208 = vmatpush1.msra.mxu0 0.0
      %1209 = vmatprep.subr.mxu0 0.0
      %1210 = vmatpush1.msra.mxu0 0.0
      %1211 = vmatprep.subr.mxu0 0.0
      %1212 = vmatpush1.msra.mxu0 0.0
      %1213 = vmatprep.subr.mxu0 0.0
      %1214 = vmatpush1.msra.mxu0 0.0
      %1215 = vmatprep.subr.mxu0 0.0
      %1216 = vmatpush1.msra.mxu0 0.0
      %1217 = vmatprep.subr.mxu0 0.0
      %1218 = vmatpush1.msra.mxu0 0.0
      %1219 = vmatprep.subr.mxu0 0.0
      %1220 = vmatpush1.msra.mxu0 0.0
      %1221 = vmatprep.subr.mxu0 0.0
      %1222 = vmatpush1.msra.mxu0 0.0
      %1223 = vmatprep.subr.mxu0 0.0
      %1224 = vmatpush1.msra.mxu0 0.0
      %1225 = vmatprep.subr.mxu0 0.0
      %1226 = vmatpush1.msra.mxu0 0.0
      %1227 = vmatprep.mubr.f32.mxu0 0.0
      %1228 = vmatmul.mubr.f32.gmra.mrb[0].mxu0 %v1158
      %v1229 = vpop.f32.mrb[0].mxu0
      %v1230 = vadd.f32 0.0, %v1229
      %v1231 = vpop.f32.mrb[0].mxu0
      %1232 = vmatprep.mubr.f32.mxu0 0.0
      %1233 = vmatmul.mubr.f32.gmra.mrb[0].mxu0 %v1161
      %v1234 = vpop.f32.mrb[0].mxu0
      %v1235 = vadd.f32 0.0, %v1234
      %v1236 = vpop.f32.mrb[0].mxu0
      %1237 = vdwg.mxu0
      %v1239 = vsel %vm754, %v945, 0
      %v1242 = vsel %vm754, %v950, 0
      %1244 = vmatprep.subr.mxu0 0.0
      %1245 = vmatpush1.msra.mxu0 %v744
      %1246 = vmatprep.subr.mxu0 0.0
      %1247 = vmatpush1.msra.mxu0 %v745
      %1248 = vmatprep.subr.mxu0 0.0
      %1249 = vmatpush1.msra.mxu0 0.0
      %1250 = vmatprep.subr.mxu0 0.0
      %1251 = vmatpush1.msra.mxu0 0.0
      %1252 = vmatprep.subr.mxu0 0.0
      %1253 = vmatpush1.msra.mxu0 0.0
      %1254 = vmatprep.subr.mxu0 0.0
      %1255 = vmatpush1.msra.mxu0 0.0
      %1256 = vmatprep.subr.mxu0 0.0
      %1257 = vmatpush1.msra.mxu0 0.0
      %1258 = vmatprep.subr.mxu0 0.0
      %1259 = vmatpush1.msra.mxu0 0.0
      %1260 = vmatprep.subr.mxu0 0.0
      %1261 = vmatpush1.msra.mxu0 0.0
      %1262 = vmatprep.subr.mxu0 0.0
      %1263 = vmatpush1.msra.mxu0 0.0
      %1264 = vmatprep.subr.mxu0 0.0
      %1265 = vmatpush1.msra.mxu0 0.0
      %1266 = vmatprep.subr.mxu0 0.0
      %1267 = vmatpush1.msra.mxu0 0.0
      %1268 = vmatprep.subr.mxu0 0.0
      %1269 = vmatpush1.msra.mxu0 0.0
      %1270 = vmatprep.subr.mxu0 0.0
      %1271 = vmatpush1.msra.mxu0 0.0
      %1272 = vmatprep.subr.mxu0 0.0
      %1273 = vmatpush1.msra.mxu0 0.0
      %1274 = vmatprep.subr.mxu0 0.0
      %1275 = vmatpush1.msra.mxu0 0.0
      %1276 = vmatprep.subr.mxu0 0.0
      %1277 = vmatpush1.msra.mxu0 0.0
      %1278 = vmatprep.subr.mxu0 0.0
      %1279 = vmatpush1.msra.mxu0 0.0
      %1280 = vmatprep.subr.mxu0 0.0
      %1281 = vmatpush1.msra.mxu0 0.0
      %1282 = vmatprep.subr.mxu0 0.0
      %1283 = vmatpush1.msra.mxu0 0.0
      %1284 = vmatprep.subr.mxu0 0.0
      %1285 = vmatpush1.msra.mxu0 0.0
      %1286 = vmatprep.subr.mxu0 0.0
      %1287 = vmatpush1.msra.mxu0 0.0
      %1288 = vmatprep.subr.mxu0 0.0
      %1289 = vmatpush1.msra.mxu0 0.0
      %1290 = vmatprep.subr.mxu0 0.0
      %1291 = vmatpush1.msra.mxu0 0.0
      %1292 = vmatprep.subr.mxu0 0.0
      %1293 = vmatpush1.msra.mxu0 0.0
      %1294 = vmatprep.subr.mxu0 0.0
      %1295 = vmatpush1.msra.mxu0 0.0
      %1296 = vmatprep.subr.mxu0 0.0
      %1297 = vmatpush1.msra.mxu0 0.0
      %1298 = vmatprep.subr.mxu0 0.0
      %1299 = vmatpush1.msra.mxu0 0.0
      %1300 = vmatprep.subr.mxu0 0.0
      %1301 = vmatpush1.msra.mxu0 0.0
      %1302 = vmatprep.subr.mxu0 0.0
      %1303 = vmatpush1.msra.mxu0 0.0
      %1304 = vmatprep.subr.mxu0 0.0
      %1305 = vmatpush1.msra.mxu0 0.0
      %1306 = vmatprep.subr.mxu0 0.0
      %1307 = vmatpush1.msra.mxu0 0.0
      %1308 = vmatprep.mubr.f32.mxu0 0.0
      %1309 = vmatmul.mubr.f32.gmra.mrb[0].mxu0 %v1239
      %v1310 = vpop.f32.mrb[0].mxu0
      %v1311 = vadd.f32 %v1230, %v1310
      %v1312 = vpop.f32.mrb[0].mxu0
      %1313 = vmatprep.mubr.f32.mxu0 0.0
      %1314 = vmatmul.mubr.f32.gmra.mrb[0].mxu0 %v1242
      %v1315 = vpop.f32.mrb[0].mxu0
      %v1316 = vadd.f32 %v1235, %v1315
      %v1317 = vpop.f32.mrb[0].mxu0
      %1318 = vdwg.mxu0
      %v1319 = vld [vmem:[%s606] sm:$0x1]
      %v1321 = vlaneseq
      %v1322 = vshrl.u32 %v1321, 7
      %v1323 = vsub.s32 0, %v1322
      %v1324 = vrot.slane %v1319, %v1323
      %v1326 = vadd.f32 %v1311, %v1324
      %v1327 = vadd.f32 %v1316, %v1324
      %v1328 = vadd.f32 %v1326, %v649
      %v1329 = vadd.f32 %v1327, %v650
      %v1330 = vld [vmem:[%s609] sm:$0x1]
      %v1331 = vld [vmem:[%s612] sm:$0x1]
      %v1332 = vsel %vm662, %v1328, 0.0
      %1333 = vadd.xlane.f32.xlu0 %v1332
      %v1334 = vpop.xlane.xlu0 %1333
      %v1335 = vsel %vm662, %v1329, 0.0
      %1336 = vadd.xlane.f32.xlu0 %v1335
      %v1337 = vpop.xlane.xlu0 %1336
      %v1338 = vrcp.pop 32.0
      %v1339 = vmul.f32 %v1334, %v1338
      %v1340 = vmul.f32 %v1337, %v1338
      %v1341 = vsub.f32 %v1328, %v1339
      %v1342 = vsub.f32 %v1329, %v1340
      %v1343 = vmul.f32 %v1341, %v1341
      %v1344 = vmul.f32 %v1342, %v1342
      %v1345 = vsel %vm662, %v1343, 0.0
      %1346 = vadd.xlane.f32.xlu0 %v1345
      %v1347 = vpop.xlane.xlu0 %1346
      %v1348 = vsel %vm662, %v1344, 0.0
      %1349 = vadd.xlane.f32.xlu0 %v1348
      %v1350 = vpop.xlane.xlu0 %1349
      %v1351 = vmul.f32 %v1347, %v1338
      %v1352 = vmul.f32 %v1350, %v1338
      %v1353 = vadd.f32 %v1351, 1e-12
      %v1354 = vadd.f32 %v1352, 1e-12
      %v1355 = vrsqrt.pop %v1353
      %v1356 = vrsqrt.pop %v1354
      %v1357 = vmul.f32 %v1341, %v1355
      %v1358 = vmul.f32 %v1342, %v1356
      %v1360 = vlaneseq
      %v1361 = vshrl.u32 %v1360, 7
      %v1362 = vsub.s32 0, %v1361
      %v1363 = vrot.slane %v1330, %v1362
      %v1365 = vmul.f32 %v1357, %v1363
      %v1366 = vmul.f32 %v1358, %v1363
      %v1368 = vlaneseq
      %v1369 = vshrl.u32 %v1368, 7
      %v1370 = vsub.s32 0, %v1369
      %v1371 = vrot.slane %v1331, %v1370
      %v1373 = vadd.f32 %v1365, %v1371
      %v1374 = vadd.f32 %v1366, %v1371
      %v1375 = vld [vmem:[%s617] sm:$0xff]
      %v1376 = vld [vmem:[%s617 + $0x8] sm:$0xff]
      %v1377 = vld [vmem:[%s617 + $0x10] sm:$0xff]
      %v1378 = vld [vmem:[%s617 + $0x18] sm:$0xff]
      %v1379 = vld [vmem:[%s620] sm:$0x1]
      %v1381 = vlaneseq
      %v1382 = vshrl.u32 %v1381, 7
      %v1383 = vsub.s32 0, %v1382
      %v1384 = vrot.slane %v1379, %v1383
      %v1387 = vsel %vm662, %v1373, 0
      %v1390 = vsel %vm662, %v1374, 0
      %1392 = vmatprep.subr.mxu0 0.0
      %1393 = vmatpush1.msra.mxu0 %v1375
      %1394 = vmatprep.subr.mxu0 0.0
      %1395 = vmatpush1.msra.mxu0 %v1376
      %1396 = vmatprep.subr.mxu0 0.0
      %1397 = vmatpush1.msra.mxu0 %v1377
      %1398 = vmatprep.subr.mxu0 0.0
      %1399 = vmatpush1.msra.mxu0 %v1378
      %1400 = vmatprep.subr.mxu0 0.0
      %1401 = vmatpush1.msra.mxu0 0.0
      %1402 = vmatprep.subr.mxu0 0.0
      %1403 = vmatpush1.msra.mxu0 0.0
      %1404 = vmatprep.subr.mxu0 0.0
      %1405 = vmatpush1.msra.mxu0 0.0
      %1406 = vmatprep.subr.mxu0 0.0
      %1407 = vmatpush1.msra.mxu0 0.0
      %1408 = vmatprep.subr.mxu0 0.0
      %1409 = vmatpush1.msra.mxu0 0.0
      %1410 = vmatprep.subr.mxu0 0.0
      %1411 = vmatpush1.msra.mxu0 0.0
      %1412 = vmatprep.subr.mxu0 0.0
      %1413 = vmatpush1.msra.mxu0 0.0
      %1414 = vmatprep.subr.mxu0 0.0
      %1415 = vmatpush1.msra.mxu0 0.0
      %1416 = vmatprep.subr.mxu0 0.0
      %1417 = vmatpush1.msra.mxu0 0.0
      %1418 = vmatprep.subr.mxu0 0.0
      %1419 = vmatpush1.msra.mxu0 0.0
      %1420 = vmatprep.subr.mxu0 0.0
      %1421 = vmatpush1.msra.mxu0 0.0
      %1422 = vmatprep.subr.mxu0 0.0
      %1423 = vmatpush1.msra.mxu0 0.0
      %1424 = vmatprep.subr.mxu0 0.0
      %1425 = vmatpush1.msra.mxu0 0.0
      %1426 = vmatprep.subr.mxu0 0.0
      %1427 = vmatpush1.msra.mxu0 0.0
      %1428 = vmatprep.subr.mxu0 0.0
      %1429 = vmatpush1.msra.mxu0 0.0
      %1430 = vmatprep.subr.mxu0 0.0
      %1431 = vmatpush1.msra.mxu0 0.0
      %1432 = vmatprep.subr.mxu0 0.0
      %1433 = vmatpush1.msra.mxu0 0.0
      %1434 = vmatprep.subr.mxu0 0.0
      %1435 = vmatpush1.msra.mxu0 0.0
      %1436 = vmatprep.subr.mxu0 0.0
      %1437 = vmatpush1.msra.mxu0 0.0
      %1438 = vmatprep.subr.mxu0 0.0
      %1439 = vmatpush1.msra.mxu0 0.0
      %1440 = vmatprep.subr.mxu0 0.0
      %1441 = vmatpush1.msra.mxu0 0.0
      %1442 = vmatprep.subr.mxu0 0.0
      %1443 = vmatpush1.msra.mxu0 0.0
      %1444 = vmatprep.subr.mxu0 0.0
      %1445 = vmatpush1.msra.mxu0 0.0
      %1446 = vmatprep.subr.mxu0 0.0
      %1447 = vmatpush1.msra.mxu0 0.0
      %1448 = vmatprep.subr.mxu0 0.0
      %1449 = vmatpush1.msra.mxu0 0.0
      %1450 = vmatprep.subr.mxu0 0.0
      %1451 = vmatpush1.msra.mxu0 0.0
      %1452 = vmatprep.subr.mxu0 0.0
      %1453 = vmatpush1.msra.mxu0 0.0
      %1454 = vmatprep.subr.mxu0 0.0
      %1455 = vmatpush1.msra.mxu0 0.0
      %1456 = vmatprep.mubr.f32.mxu0 0.0
      %1457 = vmatmul.mubr.f32.gmra.mrb[0].mxu0 %v1387
      %v1458 = vpop.f32.mrb[0].mxu0
      %v1459 = vadd.f32 %v1384, %v1458
      %v1460 = vpop.f32.mrb[0].mxu0
      %1461 = vmatprep.mubr.f32.mxu0 0.0
      %1462 = vmatmul.mubr.f32.gmra.mrb[0].mxu0 %v1390
      %v1463 = vpop.f32.mrb[0].mxu0
      %v1464 = vadd.f32 %v1384, %v1463
      %v1465 = vpop.f32.mrb[0].mxu0
      %1466 = vdwg.mxu0
      %v1467 = vmul.f32 %v1459, %v1459
      %v1468 = vmul.f32 %v1464, %v1464
      %v1469 = vmul.f32 %v1459, %v1467
      %v1470 = vmul.f32 %v1464, %v1468
      %v1471 = vmul.f32 %v1469, 0.044715
      %v1472 = vmul.f32 %v1470, 0.044715
      %v1473 = vadd.f32 %v1459, %v1471
      %v1474 = vadd.f32 %v1464, %v1472
      %v1475 = vmul.f32 %v1473, 0.7978846
      %v1476 = vmul.f32 %v1474, 0.7978846
      %v1477 = vtanh.pop %v1475
      %v1478 = vtanh.pop %v1476
      %v1479 = vadd.f32 %v1477, 1.0
      %v1480 = vadd.f32 %v1478, 1.0
      %v1481 = vmul.f32 %v1479, 0.5
      %v1482 = vmul.f32 %v1480, 0.5
      %v1483 = vmul.f32 %v1459, %v1481
      %v1484 = vmul.f32 %v1464, %v1482
      %v1485 = vld [vmem:[%s625] sm:$0xff]
      %v1486 = vld [vmem:[%s625 + $0x8] sm:$0xff]
      %v1487 = vld [vmem:[%s625 + $0x10] sm:$0xff]
      %v1488 = vld [vmem:[%s625 + $0x18] sm:$0xff]
      %v1489 = vld [vmem:[%s625 + $0x20] sm:$0xff]
      %v1490 = vld [vmem:[%s625 + $0x28] sm:$0xff]
      %v1491 = vld [vmem:[%s625 + $0x30] sm:$0xff]
      %v1492 = vld [vmem:[%s625 + $0x38] sm:$0xff]
      %v1493 = vld [vmem:[%s628] sm:$0x1]
      %v1495 = vlaneseq
      %v1496 = vshrl.u32 %v1495, 7
      %v1497 = vsub.s32 0, %v1496
      %v1498 = vrot.slane %v1493, %v1497
      %vm1500 = vcmask 523264
      %v1502 = vsel %vm1500, %v1483, 0
      %v1505 = vsel %vm1500, %v1484, 0
      %1507 = vmatprep.subr.mxu0 0.0
      %1508 = vmatpush1.msra.mxu0 %v1485
      %1509 = vmatprep.subr.mxu0 0.0
      %1510 = vmatpush1.msra.mxu0 %v1486
      %1511 = vmatprep.subr.mxu0 0.0
      %1512 = vmatpush1.msra.mxu0 %v1487
      %1513 = vmatprep.subr.mxu0 0.0
      %1514 = vmatpush1.msra.mxu0 %v1488
      %1515 = vmatprep.subr.mxu0 0.0
      %1516 = vmatpush1.msra.mxu0 %v1489
      %1517 = vmatprep.subr.mxu0 0.0
      %1518 = vmatpush1.msra.mxu0 %v1490
      %1519 = vmatprep.subr.mxu0 0.0
      %1520 = vmatpush1.msra.mxu0 %v1491
      %1521 = vmatprep.subr.mxu0 0.0
      %1522 = vmatpush1.msra.mxu0 %v1492
      %1523 = vmatprep.subr.mxu0 0.0
      %1524 = vmatpush1.msra.mxu0 0.0
      %1525 = vmatprep.subr.mxu0 0.0
      %1526 = vmatpush1.msra.mxu0 0.0
      %1527 = vmatprep.subr.mxu0 0.0
      %1528 = vmatpush1.msra.mxu0 0.0
      %1529 = vmatprep.subr.mxu0 0.0
      %1530 = vmatpush1.msra.mxu0 0.0
      %1531 = vmatprep.subr.mxu0 0.0
      %1532 = vmatpush1.msra.mxu0 0.0
      %1533 = vmatprep.subr.mxu0 0.0
      %1534 = vmatpush1.msra.mxu0 0.0
      %1535 = vmatprep.subr.mxu0 0.0
      %1536 = vmatpush1.msra.mxu0 0.0
      %1537 = vmatprep.subr.mxu0 0.0
      %1538 = vmatpush1.msra.mxu0 0.0
      %1539 = vmatprep.subr.mxu0 0.0
      %1540 = vmatpush1.msra.mxu0 0.0
      %1541 = vmatprep.subr.mxu0 0.0
      %1542 = vmatpush1.msra.mxu0 0.0
      %1543 = vmatprep.subr.mxu0 0.0
      %1544 = vmatpush1.msra.mxu0 0.0
      %1545 = vmatprep.subr.mxu0 0.0
      %1546 = vmatpush1.msra.mxu0 0.0
      %1547 = vmatprep.subr.mxu0 0.0
      %1548 = vmatpush1.msra.mxu0 0.0
      %1549 = vmatprep.subr.mxu0 0.0
      %1550 = vmatpush1.msra.mxu0 0.0
      %1551 = vmatprep.subr.mxu0 0.0
      %1552 = vmatpush1.msra.mxu0 0.0
      %1553 = vmatprep.subr.mxu0 0.0
      %1554 = vmatpush1.msra.mxu0 0.0
      %1555 = vmatprep.subr.mxu0 0.0
      %1556 = vmatpush1.msra.mxu0 0.0
      %1557 = vmatprep.subr.mxu0 0.0
      %1558 = vmatpush1.msra.mxu0 0.0
      %1559 = vmatprep.subr.mxu0 0.0
      %1560 = vmatpush1.msra.mxu0 0.0
      %1561 = vmatprep.subr.mxu0 0.0
      %1562 = vmatpush1.msra.mxu0 0.0
      %1563 = vmatprep.subr.mxu0 0.0
      %1564 = vmatpush1.msra.mxu0 0.0
      %1565 = vmatprep.subr.mxu0 0.0
      %1566 = vmatpush1.msra.mxu0 0.0
      %1567 = vmatprep.subr.mxu0 0.0
      %1568 = vmatpush1.msra.mxu0 0.0
      %1569 = vmatprep.subr.mxu0 0.0
      %1570 = vmatpush1.msra.mxu0 0.0
      %1571 = vmatprep.mubr.f32.mxu0 0.0
      %1572 = vmatmul.mubr.f32.gmra.mrb[0].mxu0 %v1502
      %v1573 = vpop.f32.mrb[0].mxu0
      %v1574 = vadd.f32 %v1498, %v1573
      %v1575 = vpop.f32.mrb[0].mxu0
      %1576 = vmatprep.mubr.f32.mxu0 0.0
      %1577 = vmatmul.mubr.f32.gmra.mrb[0].mxu0 %v1505
      %v1578 = vpop.f32.mrb[0].mxu0
      %v1579 = vadd.f32 %v1498, %v1578
      %v1580 = vpop.f32.mrb[0].mxu0
      %1581 = vdwg.mxu0
      %v1582 = vadd.f32 %v1574, %v1373
      %v1583 = vadd.f32 %v1579, %v1374
      %v1584 = vld [vmem:[%s631] sm:$0x1]
      %v1585 = vld [vmem:[%s634] sm:$0x1]
      %v1586 = vsel %vm662, %v1582, 0.0
      %1587 = vadd.xlane.f32.xlu0 %v1586
      %v1588 = vpop.xlane.xlu0 %1587
      %v1589 = vsel %vm662, %v1583, 0.0
      %1590 = vadd.xlane.f32.xlu0 %v1589
      %v1591 = vpop.xlane.xlu0 %1590
      %v1592 = vmul.f32 %v1588, %v1338
      %v1593 = vmul.f32 %v1591, %v1338
      %v1594 = vsub.f32 %v1582, %v1592
      %v1595 = vsub.f32 %v1583, %v1593
      %v1596 = vmul.f32 %v1594, %v1594
      %v1597 = vmul.f32 %v1595, %v1595
      %v1598 = vsel %vm662, %v1596, 0.0
      %1599 = vadd.xlane.f32.xlu0 %v1598
      %v1600 = vpop.xlane.xlu0 %1599
      %v1601 = vsel %vm662, %v1597, 0.0
      %1602 = vadd.xlane.f32.xlu0 %v1601
      %v1603 = vpop.xlane.xlu0 %1602
      %v1604 = vmul.f32 %v1600, %v1338
      %v1605 = vmul.f32 %v1603, %v1338
      %v1606 = vadd.f32 %v1604, 1e-12
      %v1607 = vadd.f32 %v1605, 1e-12
      %v1608 = vrsqrt.pop %v1606
      %v1609 = vrsqrt.pop %v1607
      %v1610 = vmul.f32 %v1594, %v1608
      %v1611 = vmul.f32 %v1595, %v1609
      %v1613 = vlaneseq
      %v1614 = vshrl.u32 %v1613, 7
      %v1615 = vsub.s32 0, %v1614
      %v1616 = vrot.slane %v1584, %v1615
      %v1618 = vmul.f32 %v1610, %v1616
      %v1619 = vmul.f32 %v1611, %v1616
      %v1621 = vlaneseq
      %v1622 = vshrl.u32 %v1621, 7
      %v1623 = vsub.s32 0, %v1622
      %v1624 = vrot.slane %v1585, %v1623
      %v1626 = vadd.f32 %v1618, %v1624
      %v1627 = vadd.f32 %v1619, %v1624
      %1628 = vst.msk [vmem:[#allocation2] sm:$0xff] %vm662, %v1626
      %1629 = vst.msk [vmem:[#allocation2 + $0x8] sm:$0xff] %vm662, %v1627
      %1630 = vst.msk [vmem:[%s639] sm:$0xff] %vm662, %v1626
      %1631 = vst.msk [vmem:[%s639 + $0x8] sm:$0xff] %vm662, %v1627
      %p1632 = scmp.lt.s32.totalorder %s25, 1
      %s1633 = scalar_select %p1632, %s25, 1
      %s1634 = smul.addr %s1633, 2
      %s1635 = smul.addr %s1634, 8
      %s1636 = scalar_lea.vmem %s14, %s1635
      // Predicated region
      $region81: #{custom_bert_forward.4} parent=75 // pred_check
        %p1637 = pneg %p397
      $region82: #{custom_bert_forward.4} parent=75 // pred_check_branch
        %1639 = sbr.rel (%p1637) target = $region84
      $region83: #{custom_bert_forward.4} parent=75 // pred_region
        _
      $region84: #{custom_bert_forward.4} parent=75 // pred_fallthru
        _
    $region76: #{custom_bert_forward.4} parent=5 // pred_fallthru
      _
    %p1640 = scmp.le.s32.totalorder 2, %s20
    // Predicated region
    $region85: #{custom_bert_forward.4} parent=5 // pred_check
      %p1641 = pneg %p1640
    $region86: #{custom_bert_forward.4} parent=5 // pred_check_branch
      %1643 = sbr.rel (%p1641) target = $region88
    $region87: #{custom_bert_forward.4} parent=5 // pred_region
      %s1644 = ssub.s32 %s20, 2
      // Predicated region
      $region89: #{custom_bert_forward.4} parent=87 // pred_check
        %p1645 = pneg %p403
      $region90: #{custom_bert_forward.4} parent=87 // pred_check_branch
        %1647 = sbr.rel (%p1645) target = $region92
      $region91: #{custom_bert_forward.4} parent=87 // pred_region
        %p1648 = scmp.lt.s32.totalorder %s26, 1
        %s1649 = scalar_select %p1648, %s26, 1
        %s1650 = smul.addr %s1649, 2
        %s1651 = smul.addr %s1650, 8
        %s1652 = scalar_lea.vmem %s14, %s1651
      $region92: #{custom_bert_forward.4} parent=87 // pred_fallthru
        _
    $region88: #{custom_bert_forward.4} parent=5 // pred_fallthru
      _
  $region6: #{custom_bert_forward.4} parent=0 // loop_footer
    %s24 = sadd.s32 1, %s20
  $region7: #{custom_bert_forward.4} parent=0 // loop_footer_branch
    %19 = sbr.rel target = $region3
  $region8: #{custom_bert_forward.4} parent=0 // loop_exit
    _

// kernel: custom_bert_forward.5
$region0: #{custom_bert_forward.5}
  #allocation0 [shape = 'u32[]', space=smem, size = 0x4, offset = 0x4, fixed_abs, tag = 'smem constant byte address 0x4 - core index']
  #allocation1 [shape = 'u32[144,128]{1,0:T(1,128)}', space=vmem, size = 0x12000, scoped, tag = 'internal scratch']
  %s0 = inlined_call_operand.vmem [shape: f32[2,32], index: 0, kind: input, shape index: {}]
  %s1 = inlined_call_operand.vmem [shape: f32[2,4], index: 1, kind: input, shape index: {}]
  %s2 = inlined_call_operand.vmem [shape: f32[32,32], index: 2, kind: input, shape index: {}]
  %s3 = inlined_call_operand.vmem [shape: f32[1,32], index: 3, kind: input, shape index: {}]
  %s4 = inlined_call_operand.vmem [shape: f32[32,16], index: 4, kind: input, shape index: {}]
  %s5 = inlined_call_operand.vmem [shape: f32[4,16], index: 5, kind: input, shape index: {}]
  %s6 = inlined_call_operand.vmem [shape: f32[1,16], index: 6, kind: input, shape index: {}]
  %s7 = inlined_call_operand.vmem [shape: f32[16,4], index: 7, kind: input, shape index: {}]
  %s8 = inlined_call_operand.vmem [shape: f32[1,4], index: 8, kind: input, shape index: {}]
  %s9 = inlined_call_operand.hbm [shape: f32[2,4], index: 9, kind: output, shape index: {}]
  %s10 = sld [smem:[#allocation0]]
  $region46: #{custom_bert_forward.5} parent=0
    _
  %s12 = ssub.s32 1, %s10
  %s13 = scalar_select 0, %s12, %s10
  $region1: #{custom_bert_forward.5} parent=0
    #allocation2 [shape = 'u8[1024]{0}', space=vmem, size = 0x400, scoped, tag = 'output window, operand 0, single buffered']
    #allocation3 [shape = 's32[1]{0}', space=sflag, size = 0x4, scoped, tag = 'scoped memory for custom_bert_forward.5']
    %14 = vsyncpa [#allocation3], 0
    // Predicated region
    $region2: #{custom_bert_forward.5} parent=1 // pred_check
      _
    $region3: #{custom_bert_forward.5} parent=1 // pred_check_branch
      %16 = sbr.rel (0) target = $region5
    $region4: #{custom_bert_forward.5} parent=1 // pred_region
      _
    $region5: #{custom_bert_forward.5} parent=1 // pred_fallthru
      _
    // Predicated region
    $region6: #{custom_bert_forward.5} parent=1 // pred_check
      _
    $region7: #{custom_bert_forward.5} parent=1 // pred_check_branch
      %18 = sbr.rel (0) target = $region9
    $region8: #{custom_bert_forward.5} parent=1 // pred_region
      _
    $region9: #{custom_bert_forward.5} parent=1 // pred_fallthru
      _
    // Predicated region
    $region10: #{custom_bert_forward.5} parent=1 // pred_check
      _
    $region11: #{custom_bert_forward.5} parent=1 // pred_check_branch
      %20 = sbr.rel (0) target = $region13
    $region12: #{custom_bert_forward.5} parent=1 // pred_region
      _
    $region13: #{custom_bert_forward.5} parent=1 // pred_fallthru
      _
    // Predicated region
    $region14: #{custom_bert_forward.5} parent=1 // pred_check
      _
    $region15: #{custom_bert_forward.5} parent=1 // pred_check_branch
      %22 = sbr.rel (0) target = $region17
    $region16: #{custom_bert_forward.5} parent=1 // pred_region
      _
    $region17: #{custom_bert_forward.5} parent=1 // pred_fallthru
      _
    // Predicated region
    $region18: #{custom_bert_forward.5} parent=1 // pred_check
      _
    $region19: #{custom_bert_forward.5} parent=1 // pred_check_branch
      %24 = sbr.rel (0) target = $region21
    $region20: #{custom_bert_forward.5} parent=1 // pred_region
      _
    $region21: #{custom_bert_forward.5} parent=1 // pred_fallthru
      _
    // Predicated region
    $region22: #{custom_bert_forward.5} parent=1 // pred_check
      _
    $region23: #{custom_bert_forward.5} parent=1 // pred_check_branch
      %26 = sbr.rel (0) target = $region25
    $region24: #{custom_bert_forward.5} parent=1 // pred_region
      _
    $region25: #{custom_bert_forward.5} parent=1 // pred_fallthru
      _
    // Predicated region
    $region26: #{custom_bert_forward.5} parent=1 // pred_check
      _
    $region27: #{custom_bert_forward.5} parent=1 // pred_check_branch
      %28 = sbr.rel (0) target = $region29
    $region28: #{custom_bert_forward.5} parent=1 // pred_region
      _
    $region29: #{custom_bert_forward.5} parent=1 // pred_fallthru
      _
    // Predicated region
    $region30: #{custom_bert_forward.5} parent=1 // pred_check
      _
    $region31: #{custom_bert_forward.5} parent=1 // pred_check_branch
      %30 = sbr.rel (0) target = $region33
    $region32: #{custom_bert_forward.5} parent=1 // pred_region
      _
    $region33: #{custom_bert_forward.5} parent=1 // pred_fallthru
      _
    // Predicated region
    $region34: #{custom_bert_forward.5} parent=1 // pred_check
      _
    $region35: #{custom_bert_forward.5} parent=1 // pred_check_branch
      %32 = sbr.rel (0) target = $region37
    $region36: #{custom_bert_forward.5} parent=1 // pred_region
      _
    $region37: #{custom_bert_forward.5} parent=1 // pred_fallthru
      _
    %v33 = vld [vmem:[%s0] sm:$0x3]
    %v34 = vld [vmem:[%s2] sm:$0xff]
    %v35 = vld [vmem:[%s2 + $0x8] sm:$0xff]
    %v36 = vld [vmem:[%s2 + $0x10] sm:$0xff]
    %v37 = vld [vmem:[%s2 + $0x18] sm:$0xff]
    %v38 = vld [vmem:[%s3] sm:$0x1]
    %v40 = vlaneseq
    %v41 = vshrl.u32 %v40, 7
    %v42 = vsub.s32 0, %v41
    %v43 = vrot.slane %v38, %v42
    %vm45 = vcmask 261120
    %v47 = vsel %vm45, %v33, 0
    %49 = vmatprep.subr.mxu0 0.0
    %50 = vmatpush1.msra.mxu0 %v34
    %51 = vmatprep.subr.mxu0 0.0
    %52 = vmatpush1.msra.mxu0 %v35
    %53 = vmatprep.subr.mxu0 0.0
    %54 = vmatpush1.msra.mxu0 %v36
    %55 = vmatprep.subr.mxu0 0.0
    %56 = vmatpush1.msra.mxu0 %v37
    %57 = vmatprep.subr.mxu0 0.0
    %58 = vmatpush1.msra.mxu0 0.0
    %59 = vmatprep.subr.mxu0 0.0
    %60 = vmatpush1.msra.mxu0 0.0
    %61 = vmatprep.subr.mxu0 0.0
    %62 = vmatpush1.msra.mxu0 0.0
    %63 = vmatprep.subr.mxu0 0.0
    %64 = vmatpush1.msra.mxu0 0.0
    %65 = vmatprep.subr.mxu0 0.0
    %66 = vmatpush1.msra.mxu0 0.0
    %67 = vmatprep.subr.mxu0 0.0
    %68 = vmatpush1.msra.mxu0 0.0
    %69 = vmatprep.subr.mxu0 0.0
    %70 = vmatpush1.msra.mxu0 0.0
    %71 = vmatprep.subr.mxu0 0.0
    %72 = vmatpush1.msra.mxu0 0.0
    %73 = vmatprep.subr.mxu0 0.0
    %74 = vmatpush1.msra.mxu0 0.0
    %75 = vmatprep.subr.mxu0 0.0
    %76 = vmatpush1.msra.mxu0 0.0
    %77 = vmatprep.subr.mxu0 0.0
    %78 = vmatpush1.msra.mxu0 0.0
    %79 = vmatprep.subr.mxu0 0.0
    %80 = vmatpush1.msra.mxu0 0.0
    %81 = vmatprep.subr.mxu0 0.0
    %82 = vmatpush1.msra.mxu0 0.0
    %83 = vmatprep.subr.mxu0 0.0
    %84 = vmatpush1.msra.mxu0 0.0
    %85 = vmatprep.subr.mxu0 0.0
    %86 = vmatpush1.msra.mxu0 0.0
    %87 = vmatprep.subr.mxu0 0.0
    %88 = vmatpush1.msra.mxu0 0.0
    %89 = vmatprep.subr.mxu0 0.0
    %90 = vmatpush1.msra.mxu0 0.0
    %91 = vmatprep.subr.mxu0 0.0
    %92 = vmatpush1.msra.mxu0 0.0
    %93 = vmatprep.subr.mxu0 0.0
    %94 = vmatpush1.msra.mxu0 0.0
    %95 = vmatprep.subr.mxu0 0.0
    %96 = vmatpush1.msra.mxu0 0.0
    %97 = vmatprep.subr.mxu0 0.0
    %98 = vmatpush1.msra.mxu0 0.0
    %99 = vmatprep.subr.mxu0 0.0
    %100 = vmatpush1.msra.mxu0 0.0
    %101 = vmatprep.subr.mxu0 0.0
    %102 = vmatpush1.msra.mxu0 0.0
    %103 = vmatprep.subr.mxu0 0.0
    %104 = vmatpush1.msra.mxu0 0.0
    %105 = vmatprep.subr.mxu0 0.0
    %106 = vmatpush1.msra.mxu0 0.0
    %107 = vmatprep.subr.mxu0 0.0
    %108 = vmatpush1.msra.mxu0 0.0
    %109 = vmatprep.subr.mxu0 0.0
    %110 = vmatpush1.msra.mxu0 0.0
    %111 = vmatprep.subr.mxu0 0.0
    %112 = vmatpush1.msra.mxu0 0.0
    %113 = vmatprep.mubr.f32.mxu0 0.0
    %114 = vmatmul.mubr.f32.gmra.mrb[0].mxu0 %v47
    %v115 = vpop.f32.mrb[0].mxu0
    %v116 = vadd.f32 %v43, %v115
    %v117 = vpop.f32.mrb[0].mxu0
    %118 = vdwg.mxu0
    %v119 = vtanh.pop %v116
    %v120 = vld [vmem:[%s4] sm:$0xff]
    %v121 = vld [vmem:[%s4 + $0x8] sm:$0xff]
    %v122 = vld [vmem:[%s4 + $0x10] sm:$0xff]
    %v123 = vld [vmem:[%s4 + $0x18] sm:$0xff]
    %v124 = vld [vmem:[%s1] sm:$0x3]
    %v125 = vld [vmem:[%s5] sm:$0xf]
    %vm126 = vcmask 31744
    %v128 = vsel %vm126, %v124, 0
    %vm130 = vcmask 1043456
    %v132 = vsel %vm130, %v125, 0
    %134 = vmatprep.subr.mxu0 0.0
    %135 = vmatpush1.msra.mxu0 %v132
    %136 = vmatprep.subr.mxu0 0.0
    %137 = vmatpush1.msra.mxu0 0.0
    %138 = vmatprep.subr.mxu0 0.0
    %139 = vmatpush1.msra.mxu0 0.0
    %140 = vmatprep.subr.mxu0 0.0
    %141 = vmatpush1.msra.mxu0 0.0
    %142 = vmatprep.subr.mxu0 0.0
    %143 = vmatpush1.msra.mxu0 0.0
    %144 = vmatprep.subr.mxu0 0.0
    %145 = vmatpush1.msra.mxu0 0.0
    %146 = vmatprep.subr.mxu0 0.0
    %147 = vmatpush1.msra.mxu0 0.0
    %148 = vmatprep.subr.mxu0 0.0
    %149 = vmatpush1.msra.mxu0 0.0
    %150 = vmatprep.subr.mxu0 0.0
    %151 = vmatpush1.msra.mxu0 0.0
    %152 = vmatprep.subr.mxu0 0.0
    %153 = vmatpush1.msra.mxu0 0.0
    %154 = vmatprep.subr.mxu0 0.0
    %155 = vmatpush1.msra.mxu0 0.0
    %156 = vmatprep.subr.mxu0 0.0
    %157 = vmatpush1.msra.mxu0 0.0
    %158 = vmatprep.subr.mxu0 0.0
    %159 = vmatpush1.msra.mxu0 0.0
    %160 = vmatprep.subr.mxu0 0.0
    %161 = vmatpush1.msra.mxu0 0.0
    %162 = vmatprep.subr.mxu0 0.0
    %163 = vmatpush1.msra.mxu0 0.0
    %164 = vmatprep.subr.mxu0 0.0
    %165 = vmatpush1.msra.mxu0 0.0
    %166 = vmatprep.subr.mxu0 0.0
    %167 = vmatpush1.msra.mxu0 0.0
    %168 = vmatprep.subr.mxu0 0.0
    %169 = vmatpush1.msra.mxu0 0.0
    %170 = vmatprep.subr.mxu0 0.0
    %171 = vmatpush1.msra.mxu0 0.0
    %172 = vmatprep.subr.mxu0 0.0
    %173 = vmatpush1.msra.mxu0 0.0
    %174 = vmatprep.subr.mxu0 0.0
    %175 = vmatpush1.msra.mxu0 0.0
    %176 = vmatprep.subr.mxu0 0.0
    %177 = vmatpush1.msra.mxu0 0.0
    %178 = vmatprep.subr.mxu0 0.0
    %179 = vmatpush1.msra.mxu0 0.0
    %180 = vmatprep.subr.mxu0 0.0
    %181 = vmatpush1.msra.mxu0 0.0
    %182 = vmatprep.subr.mxu0 0.0
    %183 = vmatpush1.msra.mxu0 0.0
    %184 = vmatprep.subr.mxu0 0.0
    %185 = vmatpush1.msra.mxu0 0.0
    %186 = vmatprep.subr.mxu0 0.0
    %187 = vmatpush1.msra.mxu0 0.0
    %188 = vmatprep.subr.mxu0 0.0
    %189 = vmatpush1.msra.mxu0 0.0
    %190 = vmatprep.subr.mxu0 0.0
    %191 = vmatpush1.msra.mxu0 0.0
    %192 = vmatprep.subr.mxu0 0.0
    %193 = vmatpush1.msra.mxu0 0.0
    %194 = vmatprep.subr.mxu0 0.0
    %195 = vmatpush1.msra.mxu0 0.0
    %196 = vmatprep.subr.mxu0 0.0
    %197 = vmatpush1.msra.mxu0 0.0
    %198 = vmatprep.mubr.f32.mxu0 0.0
    %199 = vmatmul.mubr.f32.gmra.mrb[0].mxu0 %v128
    %v200 = vpop.f32.mrb[0].mxu0
    %v201 = vadd.f32 0.0, %v200
    %v202 = vpop.f32.mrb[0].mxu0
    %203 = vdwg.mxu0
    %v205 = vsel %vm45, %v119, 0
    %207 = vmatprep.subr.mxu0 0.0
    %208 = vmatpush1.msra.mxu0 %v120
    %209 = vmatprep.subr.mxu0 0.0
    %210 = vmatpush1.msra.mxu0 %v121
    %211 = vmatprep.subr.mxu0 0.0
    %212 = vmatpush1.msra.mxu0 %v122
    %213 = vmatprep.subr.mxu0 0.0
    %214 = vmatpush1.msra.mxu0 %v123
    %215 = vmatprep.subr.mxu0 0.0
    %216 = vmatpush1.msra.mxu0 0.0
    %217 = vmatprep.subr.mxu0 0.0
    %218 = vmatpush1.msra.mxu0 0.0
    %219 = vmatprep.subr.mxu0 0.0
    %220 = vmatpush1.msra.mxu0 0.0
    %221 = vmatprep.subr.mxu0 0.0
    %222 = vmatpush1.msra.mxu0 0.0
    %223 = vmatprep.subr.mxu0 0.0
    %224 = vmatpush1.msra.mxu0 0.0
    %225 = vmatprep.subr.mxu0 0.0
    %226 = vmatpush1.msra.mxu0 0.0
    %227 = vmatprep.subr.mxu0 0.0
    %228 = vmatpush1.msra.mxu0 0.0
    %229 = vmatprep.subr.mxu0 0.0
    %230 = vmatpush1.msra.mxu0 0.0
    %231 = vmatprep.subr.mxu0 0.0
    %232 = vmatpush1.msra.mxu0 0.0
    %233 = vmatprep.subr.mxu0 0.0
    %234 = vmatpush1.msra.mxu0 0.0
    %235 = vmatprep.subr.mxu0 0.0
    %236 = vmatpush1.msra.mxu0 0.0
    %237 = vmatprep.subr.mxu0 0.0
    %238 = vmatpush1.msra.mxu0 0.0
    %239 = vmatprep.subr.mxu0 0.0
    %240 = vmatpush1.msra.mxu0 0.0
    %241 = vmatprep.subr.mxu0 0.0
    %242 = vmatpush1.msra.mxu0 0.0
    %243 = vmatprep.subr.mxu0 0.0
    %244 = vmatpush1.msra.mxu0 0.0
    %245 = vmatprep.subr.mxu0 0.0
    %246 = vmatpush1.msra.mxu0 0.0
    %247 = vmatprep.subr.mxu0 0.0
    %248 = vmatpush1.msra.mxu0 0.0
    %249 = vmatprep.subr.mxu0 0.0
    %250 = vmatpush1.msra.mxu0 0.0
    %251 = vmatprep.subr.mxu0 0.0
    %252 = vmatpush1.msra.mxu0 0.0
    %253 = vmatprep.subr.mxu0 0.0
    %254 = vmatpush1.msra.mxu0 0.0
    %255 = vmatprep.subr.mxu0 0.0
    %256 = vmatpush1.msra.mxu0 0.0
    %257 = vmatprep.subr.mxu0 0.0
    %258 = vmatpush1.msra.mxu0 0.0
    %259 = vmatprep.subr.mxu0 0.0
    %260 = vmatpush1.msra.mxu0 0.0
    %261 = vmatprep.subr.mxu0 0.0
    %262 = vmatpush1.msra.mxu0 0.0
    %263 = vmatprep.subr.mxu0 0.0
    %264 = vmatpush1.msra.mxu0 0.0
    %265 = vmatprep.subr.mxu0 0.0
    %266 = vmatpush1.msra.mxu0 0.0
    %267 = vmatprep.subr.mxu0 0.0
    %268 = vmatpush1.msra.mxu0 0.0
    %269 = vmatprep.subr.mxu0 0.0
    %270 = vmatpush1.msra.mxu0 0.0
    %271 = vmatprep.mubr.f32.mxu0 0.0
    %272 = vmatmul.mubr.f32.gmra.mrb[0].mxu0 %v205
    %v273 = vpop.f32.mrb[0].mxu0
    %v274 = vadd.f32 %v201, %v273
    %v275 = vpop.f32.mrb[0].mxu0
    %276 = vdwg.mxu0
    %v277 = vld [vmem:[%s6] sm:$0x1]
    %v279 = vlaneseq
    %v280 = vshrl.u32 %v279, 7
    %v281 = vsub.s32 0, %v280
    %v282 = vrot.slane %v277, %v281
    %v284 = vadd.f32 %v274, %v282
    %v285 = vtanh.pop %v284
    %v286 = vld [vmem:[%s7] sm:$0xff]
    %v287 = vld [vmem:[%s7 + $0x8] sm:$0xff]
    %v288 = vld [vmem:[%s8] sm:$0x1]
    %v290 = vlaneseq
    %v291 = vshrl.u32 %v290, 7
    %v292 = vsub.s32 0, %v291
    %v293 = vrot.slane %v288, %v292
    %vm295 = vcmask 130048
    %v297 = vsel %vm295, %v285, 0
    %299 = vmatprep.subr.mxu0 0.0
    %300 = vmatpush1.msra.mxu0 %v286
    %301 = vmatprep.subr.mxu0 0.0
    %302 = vmatpush1.msra.mxu0 %v287
    %303 = vmatprep.subr.mxu0 0.0
    %304 = vmatpush1.msra.mxu0 0.0
    %305 = vmatprep.subr.mxu0 0.0
    %306 = vmatpush1.msra.mxu0 0.0
    %307 = vmatprep.subr.mxu0 0.0
    %308 = vmatpush1.msra.mxu0 0.0
    %309 = vmatprep.subr.mxu0 0.0
    %310 = vmatpush1.msra.mxu0 0.0
    %311 = vmatprep.subr.mxu0 0.0
    %312 = vmatpush1.msra.mxu0 0.0
    %313 = vmatprep.subr.mxu0 0.0
    %314 = vmatpush1.msra.mxu0 0.0
    %315 = vmatprep.subr.mxu0 0.0
    %316 = vmatpush1.msra.mxu0 0.0
    %317 = vmatprep.subr.mxu0 0.0
    %318 = vmatpush1.msra.mxu0 0.0
    %319 = vmatprep.subr.mxu0 0.0
    %320 = vmatpush1.msra.mxu0 0.0
    %321 = vmatprep.subr.mxu0 0.0
    %322 = vmatpush1.msra.mxu0 0.0
    %323 = vmatprep.subr.mxu0 0.0
    %324 = vmatpush1.msra.mxu0 0.0
    %325 = vmatprep.subr.mxu0 0.0
    %326 = vmatpush1.msra.mxu0 0.0
    %327 = vmatprep.subr.mxu0 0.0
    %328 = vmatpush1.msra.mxu0 0.0
    %329 = vmatprep.subr.mxu0 0.0
    %330 = vmatpush1.msra.mxu0 0.0
    %331 = vmatprep.subr.mxu0 0.0
    %332 = vmatpush1.msra.mxu0 0.0
    %333 = vmatprep.subr.mxu0 0.0
    %334 = vmatpush1.msra.mxu0 0.0
    %335 = vmatprep.subr.mxu0 0.0
    %336 = vmatpush1.msra.mxu0 0.0
    %337 = vmatprep.subr.mxu0 0.0
    %338 = vmatpush1.msra.mxu0 0.0
    %339 = vmatprep.subr.mxu0 0.0
    %340 = vmatpush1.msra.mxu0 0.0
    %341 = vmatprep.subr.mxu0 0.0
    %342 = vmatpush1.msra.mxu0 0.0
    %343 = vmatprep.subr.mxu0 0.0
    %344 = vmatpush1.msra.mxu0 0.0
    %345 = vmatprep.subr.mxu0 0.0
    %346 = vmatpush1.msra.mxu0 0.0
    %347 = vmatprep.subr.mxu0 0.0
    %348 = vmatpush1.msra.mxu0 0.0
    %349 = vmatprep.subr.mxu0 0.0
    %350 = vmatpush1.msra.mxu0 0.0
    %351 = vmatprep.subr.mxu0 0.0
    %352 = vmatpush1.msra.mxu0 0.0
    %353 = vmatprep.subr.mxu0 0.0
    %354 = vmatpush1.msra.mxu0 0.0
    %355 = vmatprep.subr.mxu0 0.0
    %356 = vmatpush1.msra.mxu0 0.0
    %357 = vmatprep.subr.mxu0 0.0
    %358 = vmatpush1.msra.mxu0 0.0
    %359 = vmatprep.subr.mxu0 0.0
    %360 = vmatpush1.msra.mxu0 0.0
    %361 = vmatprep.subr.mxu0 0.0
    %362 = vmatpush1.msra.mxu0 0.0
    %363 = vmatprep.mubr.f32.mxu0 0.0
    %364 = vmatmul.mubr.f32.gmra.mrb[0].mxu0 %v297
    %v365 = vpop.f32.mrb[0].mxu0
    %v366 = vadd.f32 %v293, %v365
    %v367 = vpop.f32.mrb[0].mxu0
    %368 = vdwg.mxu0
    %vm369 = vcmask 25600
    %370 = vst.msk [vmem:[#allocation2] sm:$0x3] %vm369, %v366
    // Predicated region
    $region38: #{custom_bert_forward.5} parent=1 // pred_check
      _
    $region39: #{custom_bert_forward.5} parent=1 // pred_check_branch
      %372 = sbr.rel (0) target = $region41
    $region40: #{custom_bert_forward.5} parent=1 // pred_region
      %s374 = ssub.s32 32, 32
      %375 = vsyncadd [#allocation3], %s374
      %s377 = sshll.u32 [#allocation2], 4
      %s378 = int_to_ptr.vmem [resolvable:$true] %s377
      %380 = dma.vmem_to_hbm [thread:$0]  %s378, 32, %s9, [#allocation3]
    $region41: #{custom_bert_forward.5} parent=1 // pred_fallthru
      _
    // Predicated region
    $region42: #{custom_bert_forward.5} parent=1 // pred_check
      _
    $region43: #{custom_bert_forward.5} parent=1 // pred_check_branch
      %382 = sbr.rel (0) target = $region45
    $region44: #{custom_bert_forward.5} parent=1 // pred_region
      %383 = dma.done [#allocation3], 32
    $region45: #{custom_bert_forward.5} parent=1 // pred_fallthru
      _
    %384 = vsyncpa [#allocation3], 1

</llo_original>
